<compile_context>
chip_gen: v7x
topology: tpu7x:2x2x1
jax: 0.10.0
libtpu: 0.0.40
codegen_flags: <defaults>
</compile_context>

<pallas_src>
import jax
import jax.numpy as jnp
import numpy as np
from jax.experimental import pallas as pl
from jax.experimental.pallas import tpu as pltpu

LANE = 128


def _bn_affine(gamma, beta, mean, var, eps=1e-5):
    scale = gamma / jnp.sqrt(var + eps)
    shift = beta - mean * scale
    return scale[None, :], shift[None, :]          # (1, C) rows for broadcasting


def _round_up(n, m=LANE):
    return ((n + m - 1) // m) * m


def _pad2(a, rows, cols):
    return jnp.pad(a, ((0, rows - a.shape[0]), (0, cols - a.shape[1])))


# ---------------------------------------------------------------------------
# Kernel: one batch element per grid step.
# ---------------------------------------------------------------------------
def bottleneck_kernel(x_ref,                      # (1, L, Cp)   input, f32
                      w1_ref, b1_ref,             # conv1 1x1 (bf16, bn1 folded) + shift
                      wc_ref, b0_ref,             # SplAt k=3 conv taps (3,GWp,GWp bf16) + shift
                      wfc1_ref, bfc1_ref,         # fc1 (bf16, splat-bn folded) + shift
                      wfc2_ref, bfc2_ref,         # fc2 (bf16) + bias
                      w3_ref, b3_ref,             # conv3 1x1 (bf16, bn3 folded) + shift
                      o_ref):                     # (1, L, Coutp) output, f32
    L = x_ref.shape[1]
    bf16 = jnp.bfloat16

    x2 = x_ref[0]                                                # (L, Cp) f32

    # --- conv1 (1x1) [bn1 scale folded into weight] + shift + relu ----------
    h = jnp.dot(x2.astype(bf16), w1_ref[...],
                preferred_element_type=jnp.float32)
    h = jnp.maximum(h + b1_ref[...], 0.0)                        # (L, GWp) f32

    # --- SplAtConv1d conv (k=3, pad=1): three accumulating dots --------------
    # Shifted copies via sublane roll within this batch block; the rows that
    # would wrap around the block are zeroed with an in-kernel iota mask
    # (k=3 "same" padding semantics).
    rows = jax.lax.broadcasted_iota(jnp.int32, (L, 1), 0)
    h_m1 = jnp.where(rows != 0, pltpu.roll(h, shift=1, axis=0), 0.0)      # x[l-1]
    h_p1 = jnp.where(rows != L - 1, pltpu.roll(h, shift=L - 1, axis=0), 0.0)  # x[l+1]

    c = jnp.dot(h_m1.astype(bf16), wc_ref[0], preferred_element_type=jnp.float32)
    c = c + jnp.dot(h.astype(bf16), wc_ref[1], preferred_element_type=jnp.float32)
    c = c + jnp.dot(h_p1.astype(bf16), wc_ref[2], preferred_element_type=jnp.float32)
    c = jnp.maximum(c + b0_ref[...], 0.0)                        # (L, GWp) f32

    # --- split-attention (radix=1): GAP over L -> fc1 -> relu -> fc2 -> sigmoid
    gap = jnp.mean(c, axis=0, keepdims=True)                     # (1, GWp)
    g = jnp.dot(gap.astype(bf16), wfc1_ref[...],
                preferred_element_type=jnp.float32)
    g = jnp.maximum(g + bfc1_ref[...], 0.0)                      # (1, ICp)
    att = jnp.dot(g.astype(bf16), wfc2_ref[...],
                  preferred_element_type=jnp.float32) + bfc2_ref[...]
    att = jax.nn.sigmoid(att)                                    # (1, GWp)

    sp = att * c                                                 # (L, GWp) f32

    # --- conv3 (1x1) [bn3 scale folded] + shift + residual + relu ------------
    o = jnp.dot(sp.astype(bf16), w3_ref[...],
                preferred_element_type=jnp.float32)
    # Residual re-reads the VMEM-resident x block (Cin == Cout, pad lanes = 0).
    o = jnp.maximum(o + b3_ref[...] + x_ref[0], 0.0)
    o_ref[0] = o


# ---------------------------------------------------------------------------
# Parameter preparation (BN folding, lane padding, bf16 pre-cast)
# ---------------------------------------------------------------------------
def prepare_params(params):
    (w1, s1, b1, wc, s0, b0, wfc1, bfc1, sfc, bfc, wfc2, bfc2, w3, s3, b3) = params
    Cin, GW = w1.shape
    IC = wfc1.shape[1]
    Cout = w3.shape[1]
    Cp, GWp, ICp, Coutp = (_round_up(c) for c in (Cin, GW, IC, Cout))

    # Inference-mode BN is affine: (x@w)*s + b == x@(w*s) + b  -> fold scales.
    w1f = w1 * s1                      # (Cin, GW)
    wcf = wc * s0                      # (3, GW, GW); scales output channels
    wfc1f = wfc1 * sfc                 # (GW, IC)
    bfc1f = bfc1 * sfc + bfc           # (1, IC)  fc1 bias folded through its bn
    w3f = w3 * s3                      # (GW, Cout)

    bf16 = jnp.bfloat16
    w1p = _pad2(w1f, Cp, GWp).astype(bf16)
    wcp = jnp.stack([_pad2(wcf[t], GWp, GWp) for t in range(3)],
                    axis=0).astype(bf16)                 # (3, GWp, GWp)
    wfc1p = _pad2(wfc1f, GWp, ICp).astype(bf16)
    wfc2p = _pad2(wfc2, ICp, GWp).astype(bf16)
    w3p = _pad2(w3f, GWp, Coutp).astype(bf16)

    b1p = _pad2(b1, 1, GWp)
    b0p = _pad2(b0, 1, GWp)
    bfc1p = _pad2(bfc1f, 1, ICp)
    bfc2p = _pad2(bfc2, 1, GWp)
    b3p = _pad2(b3, 1, Coutp)

    return [w1p, b1p, wcp, b0p, wfc1p, bfc1p, wfc2p, bfc2p, w3p, b3p]


def resnest_bottleneck_forward(x_nlc, params):
    B, L, Cin = x_nlc.shape
    Cout = params[12].shape[1]                  # w3: (GW, Cout)
    assert Cin == Cout, "residual path needs Cin == Cout (downsample not implemented)"

    kparams = prepare_params(params)
    Cp = kparams[0].shape[0]                    # padded Cin
    GWp = kparams[0].shape[1]
    ICp = kparams[4].shape[1]
    Coutp = kparams[8].shape[1]                 # padded Cout

    # Zero-pad channels to a lane multiple (pad lanes stay 0 end-to-end).
    # In a production chain of blocks the padded NLC layout would be kept
    # across layers, making this pad and the final slice disappear.
    xp = jnp.pad(x_nlc, ((0, 0), (0, 0), (0, Cp - Cin)))

    inputs = [xp] + kparams

    in_specs = [
        pl.BlockSpec((1, L, Cp), lambda b: (b, 0, 0)),        # x: one batch / step
        pl.BlockSpec((Cp, GWp), lambda b: (0, 0)),            # w1 (resident)
        pl.BlockSpec((1, GWp), lambda b: (0, 0)),             # b1
        pl.BlockSpec((3, GWp, GWp), lambda b: (0, 0, 0)),     # wc taps
        pl.BlockSpec((1, GWp), lambda b: (0, 0)),             # b0
        pl.BlockSpec((GWp, ICp), lambda b: (0, 0)),           # wfc1
        pl.BlockSpec((1, ICp), lambda b: (0, 0)),             # bfc1
        pl.BlockSpec((ICp, GWp), lambda b: (0, 0)),           # wfc2
        pl.BlockSpec((1, GWp), lambda b: (0, 0)),             # bfc2
        pl.BlockSpec((GWp, Coutp), lambda b: (0, 0)),         # w3
        pl.BlockSpec((1, Coutp), lambda b: (0, 0)),           # b3
    ]
    out_spec = pl.BlockSpec((1, L, Coutp), lambda b: (b, 0, 0))

    # VMEM budget: per-step activation blocks + f32 temporaries, x2 for double
    # buffering, plus weights (resident).  Capped at 48 MiB so we never request
    # all of v7x's 64 MiB; floor of 16 MiB leaves generous compiler headroom.
    weight_bytes = sum(int(np.prod(a.shape)) * jnp.dtype(a.dtype).itemsize
                       for a in kparams)
    act_bytes = (L * Cp + L * Coutp) * 4
    tmp_bytes = 8 * L * max(Cp, GWp, Coutp) * 4
    vmem_limit = int(min(max(2 * (act_bytes + tmp_bytes) + 2 * weight_bytes,
                             16 * 1024 * 1024),
                         48 * 1024 * 1024))

    out = pl.pallas_call(
        bottleneck_kernel,
        out_shape=jax.ShapeDtypeStruct((B, L, Coutp), jnp.float32),
        grid_spec=pltpu.PrefetchScalarGridSpec(
            num_scalar_prefetch=0,
            grid=(B,),                          # one batch element per grid step
            in_specs=in_specs,
            out_specs=out_spec,
        ),
        compiler_params=pltpu.CompilerParams(
            dimension_semantics=("parallel",),  # batch-independent -> megacore on v7x
            vmem_limit_bytes=vmem_limit,
        ),
    )(*inputs)
    return out[:, :, :Cout]


# ---------------------------------------------------------------------------
# Pure-JAX reference (f32, unfolded params) for validation
# ---------------------------------------------------------------------------
def ref_forward(x_nlc, params):
    (w1, s1, b1, wc, s0, b0, wfc1, bfc1, sfc, bfc, wfc2, bfc2, w3, s3, b3) = params
    h = jnp.maximum(jnp.einsum('blc,cg->blg', x_nlc, w1) * s1 + b1, 0.0)
    hm1 = jnp.concatenate([jnp.zeros_like(h[:, :1]), h[:, :-1]], axis=1)
    hp1 = jnp.concatenate([h[:, 1:], jnp.zeros_like(h[:, :1])], axis=1)
    c = (jnp.einsum('blg,gh->blh', hm1, wc[0])
         + jnp.einsum('blg,gh->blh', h, wc[1])
         + jnp.einsum('blg,gh->blh', hp1, wc[2]))
    c = jnp.maximum(c * s0 + b0, 0.0)
    gap = jnp.mean(c, axis=1, keepdims=True)
    g = jnp.maximum((jnp.einsum('bli,io->blo', gap, wfc1) + bfc1) * sfc + bfc, 0.0)
    att = jax.nn.sigmoid(jnp.einsum('bli,io->blo', g, wfc2) + bfc2)
    sp = att * c
    o = jnp.einsum('blg,go->blo', sp, w3) * s3 + b3
    return jnp.maximum(o + x_nlc, 0.0)


if __name__ == "__main__":
    key = jax.random.PRNGKey(0)

    # Module hyperparameters (defaults of ResNeStBottleneck)
    B, L = 2, 16
    planes = 8
    expansion = 4
    cardinality = 1
    inplanes = planes * expansion            # 32 -> residual add works w/o downsample
    GW = int(planes * (64 / 64.0)) * cardinality   # group_width = 8
    IC = max(GW * 1 // 4, 32)                # SplAtConv1d inter_channels (radix=1) = 32
    Cout = planes * expansion                # 32

    ks = list(jax.random.split(key, 32))
    nk = iter(ks)

    def nrm(shape, scale=0.1):
        return scale * jax.random.normal(next(nk), shape, jnp.float32)

    def bn_params(C):
        gamma = 1.0 + 0.1 * jax.random.normal(next(nk), (C,), jnp.float32)
        beta = 0.1 * jax.random.normal(next(nk), (C,), jnp.float32)
        mean = 0.1 * jax.random.normal(next(nk), (C,), jnp.float32)
        var = 0.5 + jax.random.uniform(next(nk), (C,), jnp.float32)
        return _bn_affine(gamma, beta, mean, var)

    # Weights in matmul layout: (in_ch, out_ch); k=3 conv as 3 taps.
    w1 = nrm((inplanes, GW))                 # conv1 1x1 (no bias)
    s1, b1 = bn_params(GW)                   # bn1
    wc = nrm((3, GW, GW))                    # SplAt conv k=3 (tap0=x[l-1],1=x[l],2=x[l+1])
    s0, b0 = bn_params(GW)                   # SplAt bn0
    wfc1 = nrm((GW, IC))                     # fc1 1x1 (has bias)
    bfc1 = nrm((1, IC))
    sfc, bfc = bn_params(IC)                 # SplAt bn1
    wfc2 = nrm((IC, GW))                     # fc2 1x1 (has bias)
    bfc2 = nrm((1, GW))
    w3 = nrm((GW, Cout))                     # conv3 1x1 (no bias)
    s3, b3 = bn_params(Cout)                 # bn3

    params = [w1, s1, b1, wc, s0, b0, wfc1, bfc1, sfc, bfc, wfc2, bfc2, w3, s3, b3]

    # Input in PyTorch NCL layout, converted to NLC for the kernel.
    x_ncl = jax.random.normal(next(nk), (B, inplanes, L), jnp.float32)
    x_nlc = jnp.transpose(x_ncl, (0, 2, 1))

    out = resnest_bottleneck_forward(x_nlc, params)
    out = jax.block_until_ready(out)

    ref = jax.block_until_ready(ref_forward(x_nlc, params))
    np.testing.assert_allclose(np.asarray(out), np.asarray(ref), rtol=2e-2, atol=2e-2)

    print("KERNEL_OK")
</pallas_src>

<mosaic_0001>
module attributes {stable_mosaic.version = 11 : i64} {
  func.func @bottleneck_kernel(%arg0: i32, %arg1: memref<1x16x128xf32, #tpu.memory_space<vmem>>, %arg2: memref<128x128xbf16, #tpu.memory_space<vmem>>, %arg3: memref<1x128xf32, #tpu.memory_space<vmem>>, %arg4: memref<3x128x128xbf16, #tpu.memory_space<vmem>>, %arg5: memref<1x128xf32, #tpu.memory_space<vmem>>, %arg6: memref<128x128xbf16, #tpu.memory_space<vmem>>, %arg7: memref<1x128xf32, #tpu.memory_space<vmem>>, %arg8: memref<128x128xbf16, #tpu.memory_space<vmem>>, %arg9: memref<1x128xf32, #tpu.memory_space<vmem>>, %arg10: memref<128x128xbf16, #tpu.memory_space<vmem>>, %arg11: memref<1x128xf32, #tpu.memory_space<vmem>>, %arg12: memref<1x16x128xf32, #tpu.memory_space<vmem>>) attributes {dimension_semantics = [#tpu.dimension_semantics<parallel>], iteration_bounds = array<i64: 2>, scalar_prefetch = 0 : i64, scratch_operands = 0 : i64, tpu.core_type = #tpu.core_type<tc>, window_params = [{transform_indices = @transform_0, window_bounds = array<i64: 1, 16, 128>}, {pipeline_mode = #tpu.pipeline_mode<synchronous>, transform_indices = @transform_1, window_bounds = array<i64: 128, 128>}, {pipeline_mode = #tpu.pipeline_mode<synchronous>, transform_indices = @transform_2, window_bounds = array<i64: 1, 128>}, {pipeline_mode = #tpu.pipeline_mode<synchronous>, transform_indices = @transform_3, window_bounds = array<i64: 3, 128, 128>}, {pipeline_mode = #tpu.pipeline_mode<synchronous>, transform_indices = @transform_4, window_bounds = array<i64: 1, 128>}, {pipeline_mode = #tpu.pipeline_mode<synchronous>, transform_indices = @transform_5, window_bounds = array<i64: 128, 128>}, {pipeline_mode = #tpu.pipeline_mode<synchronous>, transform_indices = @transform_6, window_bounds = array<i64: 1, 128>}, {pipeline_mode = #tpu.pipeline_mode<synchronous>, transform_indices = @transform_7, window_bounds = array<i64: 128, 128>}, {pipeline_mode = #tpu.pipeline_mode<synchronous>, transform_indices = @transform_8, window_bounds = array<i64: 1, 128>}, {pipeline_mode = #tpu.pipeline_mode<synchronous>, transform_indices = @transform_9, window_bounds = array<i64: 128, 128>}, {pipeline_mode = #tpu.pipeline_mode<synchronous>, transform_indices = @transform_10, window_bounds = array<i64: 1, 128>}, {transform_indices = @transform_11, window_bounds = array<i64: 1, 16, 128>}]} {
    %c0 = arith.constant 0 : index
    %c0_0 = arith.constant 0 : index
    %c0_1 = arith.constant 0 : index
    %0 = vector.load %arg1[%c0, %c0_0, %c0_1] : memref<1x16x128xf32, #tpu.memory_space<vmem>>, vector<1x16x128xf32>
    %1 = vector.shape_cast %0 : vector<1x16x128xf32> to vector<16x128xf32>
    %2 = arith.truncf %1 : vector<16x128xf32> to vector<16x128xbf16>
    %c0_2 = arith.constant 0 : index
    %c0_3 = arith.constant 0 : index
    %3 = vector.load %arg2[%c0_2, %c0_3] : memref<128x128xbf16, #tpu.memory_space<vmem>>, vector<128x128xbf16>
    %cst = arith.constant dense<0.000000e+00> : vector<16x128xf32>
    %4 = tpu.matmul %2, %3, %cst {dimension_numbers = #tpu.dot_dimension_numbers<[1], [0], [0], [1], [0, 0, 1, 1], [], []>} : vector<16x128xbf16>, vector<128x128xbf16>, vector<16x128xf32> -> vector<16x128xf32>
    %c0_4 = arith.constant 0 : index
    %c0_5 = arith.constant 0 : index
    %5 = vector.load %arg3[%c0_4, %c0_5] : memref<1x128xf32, #tpu.memory_space<vmem>>, vector<1x128xf32>
    %6 = vector.broadcast %5 : vector<1x128xf32> to vector<16x128xf32>
    %7 = arith.addf %4, %6 : vector<16x128xf32>
    %cst_6 = arith.constant 0.000000e+00 : f32
    %8 = vector.broadcast %cst_6 : f32 to vector<16x128xf32>
    %9 = arith.maximumf %7, %8 : vector<16x128xf32>
    %10 = tpu.iota {dimensions = array<i32: 0>} : vector<16x1xi32>
    %c0_i32 = arith.constant 0 : i32
    %11 = vector.broadcast %c0_i32 : i32 to vector<16x1xi32>
    %12 = arith.cmpi ne, %10, %11 : vector<16x1xi32>
    %c1_i32 = arith.constant 1 : i32
    %13 = tpu.dynamic_rotate %9 by %c1_i32 dim 0 : vector<16x128xf32>, i32 -> vector<16x128xf32>
    %cst_7 = arith.constant 0.000000e+00 : f32
    %14 = vector.shape_cast %12 : vector<16x1xi1> to vector<16x1xi1>
    %15 = vector.broadcast %14 : vector<16x1xi1> to vector<16x128xi1>
    %16 = vector.broadcast %cst_7 : f32 to vector<16x128xf32>
    %17 = arith.select %15, %13, %16 : vector<16x128xi1>, vector<16x128xf32>
    %c15_i32 = arith.constant 15 : i32
    %18 = vector.broadcast %c15_i32 : i32 to vector<16x1xi32>
    %19 = arith.cmpi ne, %10, %18 : vector<16x1xi32>
    %c15_i32_8 = arith.constant 15 : i32
    %20 = tpu.dynamic_rotate %9 by %c15_i32_8 dim 0 : vector<16x128xf32>, i32 -> vector<16x128xf32>
    %cst_9 = arith.constant 0.000000e+00 : f32
    %21 = vector.shape_cast %19 : vector<16x1xi1> to vector<16x1xi1>
    %22 = vector.broadcast %21 : vector<16x1xi1> to vector<16x128xi1>
    %23 = vector.broadcast %cst_9 : f32 to vector<16x128xf32>
    %24 = arith.select %22, %20, %23 : vector<16x128xi1>, vector<16x128xf32>
    %25 = arith.truncf %17 : vector<16x128xf32> to vector<16x128xbf16>
    %c0_10 = arith.constant 0 : index
    %c0_11 = arith.constant 0 : index
    %c0_12 = arith.constant 0 : index
    %26 = vector.load %arg4[%c0_10, %c0_11, %c0_12] : memref<3x128x128xbf16, #tpu.memory_space<vmem>>, vector<1x128x128xbf16>
    %27 = vector.shape_cast %26 : vector<1x128x128xbf16> to vector<128x128xbf16>
    %cst_13 = arith.constant dense<0.000000e+00> : vector<16x128xf32>
    %28 = tpu.matmul %25, %27, %cst_13 {dimension_numbers = #tpu.dot_dimension_numbers<[1], [0], [0], [1], [0, 0, 1, 1], [], []>} : vector<16x128xbf16>, vector<128x128xbf16>, vector<16x128xf32> -> vector<16x128xf32>
    %29 = arith.truncf %9 : vector<16x128xf32> to vector<16x128xbf16>
    %c1 = arith.constant 1 : index
    %c0_14 = arith.constant 0 : index
    %c0_15 = arith.constant 0 : index
    %30 = vector.load %arg4[%c1, %c0_14, %c0_15] : memref<3x128x128xbf16, #tpu.memory_space<vmem>>, vector<1x128x128xbf16>
    %31 = vector.shape_cast %30 : vector<1x128x128xbf16> to vector<128x128xbf16>
    %cst_16 = arith.constant dense<0.000000e+00> : vector<16x128xf32>
    %32 = tpu.matmul %29, %31, %cst_16 {dimension_numbers = #tpu.dot_dimension_numbers<[1], [0], [0], [1], [0, 0, 1, 1], [], []>} : vector<16x128xbf16>, vector<128x128xbf16>, vector<16x128xf32> -> vector<16x128xf32>
    %33 = arith.addf %28, %32 : vector<16x128xf32>
    %34 = arith.truncf %24 : vector<16x128xf32> to vector<16x128xbf16>
    %c2 = arith.constant 2 : index
    %c0_17 = arith.constant 0 : index
    %c0_18 = arith.constant 0 : index
    %35 = vector.load %arg4[%c2, %c0_17, %c0_18] : memref<3x128x128xbf16, #tpu.memory_space<vmem>>, vector<1x128x128xbf16>
    %36 = vector.shape_cast %35 : vector<1x128x128xbf16> to vector<128x128xbf16>
    %cst_19 = arith.constant dense<0.000000e+00> : vector<16x128xf32>
    %37 = tpu.matmul %34, %36, %cst_19 {dimension_numbers = #tpu.dot_dimension_numbers<[1], [0], [0], [1], [0, 0, 1, 1], [], []>} : vector<16x128xbf16>, vector<128x128xbf16>, vector<16x128xf32> -> vector<16x128xf32>
    %38 = arith.addf %33, %37 : vector<16x128xf32>
    %c0_20 = arith.constant 0 : index
    %c0_21 = arith.constant 0 : index
    %39 = vector.load %arg5[%c0_20, %c0_21] : memref<1x128xf32, #tpu.memory_space<vmem>>, vector<1x128xf32>
    %40 = vector.broadcast %39 : vector<1x128xf32> to vector<16x128xf32>
    %41 = arith.addf %38, %40 : vector<16x128xf32>
    %cst_22 = arith.constant 0.000000e+00 : f32
    %42 = vector.broadcast %cst_22 : f32 to vector<16x128xf32>
    %43 = arith.maximumf %41, %42 : vector<16x128xf32>
    %cst_23 = arith.constant dense<0.000000e+00> : vector<128xf32>
    %44 = vector.multi_reduction <add>, %43, %cst_23 [0] : vector<16x128xf32> to vector<128xf32>
    %45 = vector.shape_cast %44 : vector<128xf32> to vector<1x128xf32>
    %cst_24 = arith.constant 1.600000e+01 : f32
    %46 = vector.broadcast %cst_24 : f32 to vector<1x128xf32>
    %47 = arith.divf %45, %46 : vector<1x128xf32>
    %48 = arith.truncf %47 : vector<1x128xf32> to vector<1x128xbf16>
    %c0_25 = arith.constant 0 : index
    %c0_26 = arith.constant 0 : index
    %49 = vector.load %arg6[%c0_25, %c0_26] : memref<128x128xbf16, #tpu.memory_space<vmem>>, vector<128x128xbf16>
    %cst_27 = arith.constant dense<0.000000e+00> : vector<1x128xf32>
    %50 = tpu.matmul %48, %49, %cst_27 {dimension_numbers = #tpu.dot_dimension_numbers<[1], [0], [0], [1], [0, 0, 1, 1], [], []>} : vector<1x128xbf16>, vector<128x128xbf16>, vector<1x128xf32> -> vector<1x128xf32>
    %c0_28 = arith.constant 0 : index
    %c0_29 = arith.constant 0 : index
    %51 = vector.load %arg7[%c0_28, %c0_29] : memref<1x128xf32, #tpu.memory_space<vmem>>, vector<1x128xf32>
    %52 = arith.addf %50, %51 : vector<1x128xf32>
    %cst_30 = arith.constant 0.000000e+00 : f32
    %53 = vector.broadcast %cst_30 : f32 to vector<1x128xf32>
    %54 = arith.maximumf %52, %53 : vector<1x128xf32>
    %55 = arith.truncf %54 : vector<1x128xf32> to vector<1x128xbf16>
    %c0_31 = arith.constant 0 : index
    %c0_32 = arith.constant 0 : index
    %56 = vector.load %arg8[%c0_31, %c0_32] : memref<128x128xbf16, #tpu.memory_space<vmem>>, vector<128x128xbf16>
    %cst_33 = arith.constant dense<0.000000e+00> : vector<1x128xf32>
    %57 = tpu.matmul %55, %56, %cst_33 {dimension_numbers = #tpu.dot_dimension_numbers<[1], [0], [0], [1], [0, 0, 1, 1], [], []>} : vector<1x128xbf16>, vector<128x128xbf16>, vector<1x128xf32> -> vector<1x128xf32>
    %c0_34 = arith.constant 0 : index
    %c0_35 = arith.constant 0 : index
    %58 = vector.load %arg9[%c0_34, %c0_35] : memref<1x128xf32, #tpu.memory_space<vmem>>, vector<1x128xf32>
    %59 = arith.addf %57, %58 : vector<1x128xf32>
    %60 = arith.negf %59 : vector<1x128xf32>
    %61 = math.exp %60 : vector<1x128xf32>
    %cst_36 = arith.constant 1.000000e+00 : f32
    %62 = vector.broadcast %cst_36 : f32 to vector<1x128xf32>
    %63 = arith.addf %62, %61 : vector<1x128xf32>
    %64 = arith.divf %62, %63 : vector<1x128xf32>
    %65 = vector.broadcast %64 : vector<1x128xf32> to vector<16x128xf32>
    %66 = arith.mulf %65, %43 : vector<16x128xf32>
    %67 = arith.truncf %66 : vector<16x128xf32> to vector<16x128xbf16>
    %c0_37 = arith.constant 0 : index
    %c0_38 = arith.constant 0 : index
    %68 = vector.load %arg10[%c0_37, %c0_38] : memref<128x128xbf16, #tpu.memory_space<vmem>>, vector<128x128xbf16>
    %cst_39 = arith.constant dense<0.000000e+00> : vector<16x128xf32>
    %69 = tpu.matmul %67, %68, %cst_39 {dimension_numbers = #tpu.dot_dimension_numbers<[1], [0], [0], [1], [0, 0, 1, 1], [], []>} : vector<16x128xbf16>, vector<128x128xbf16>, vector<16x128xf32> -> vector<16x128xf32>
    %c0_40 = arith.constant 0 : index
    %c0_41 = arith.constant 0 : index
    %70 = vector.load %arg11[%c0_40, %c0_41] : memref<1x128xf32, #tpu.memory_space<vmem>>, vector<1x128xf32>
    %71 = vector.broadcast %70 : vector<1x128xf32> to vector<16x128xf32>
    %72 = arith.addf %69, %71 : vector<16x128xf32>
    %c0_42 = arith.constant 0 : index
    %c0_43 = arith.constant 0 : index
    %c0_44 = arith.constant 0 : index
    %73 = vector.load %arg1[%c0_42, %c0_43, %c0_44] : memref<1x16x128xf32, #tpu.memory_space<vmem>>, vector<1x16x128xf32>
    %74 = vector.shape_cast %73 : vector<1x16x128xf32> to vector<16x128xf32>
    %75 = arith.addf %72, %74 : vector<16x128xf32>
    %cst_45 = arith.constant 0.000000e+00 : f32
    %76 = vector.broadcast %cst_45 : f32 to vector<16x128xf32>
    %77 = arith.maximumf %75, %76 : vector<16x128xf32>
    %c0_46 = arith.constant 0 : index
    %c0_47 = arith.constant 0 : index
    %c0_48 = arith.constant 0 : index
    %78 = vector.load %arg12[%c0_46, %c0_47, %c0_48] : memref<1x16x128xf32, #tpu.memory_space<vmem>>, vector<1x16x128xf32>
    %79 = vector.shape_cast %78 : vector<1x16x128xf32> to vector<16x128xf32>
    %80 = vector.shape_cast %77 : vector<16x128xf32> to vector<1x16x128xf32>
    tpu.vector_store %arg12[%c0_46, %c0_47, %c0_48], %80 {strides = array<i32>} : memref<1x16x128xf32, #tpu.memory_space<vmem>>, vector<1x16x128xf32>,
    return
  }
  func.func @transform_0(%arg0: i32) -> (i32, i32, i32) {
    %c0_i32 = arith.constant 0 : i32
    %c0_i32_0 = arith.constant 0 : i32
    %c0_i32_1 = arith.constant 0 : i32
    return %arg0, %c0_i32, %c0_i32_0 : i32, i32, i32
  }
  func.func @transform_1(%arg0: i32) -> (i32, i32) {
    %c0_i32 = arith.constant 0 : i32
    %c0_i32_0 = arith.constant 0 : i32
    %c0_i32_1 = arith.constant 0 : i32
    return %c0_i32, %c0_i32_0 : i32, i32
  }
  func.func @transform_2(%arg0: i32) -> (i32, i32) {
    %c0_i32 = arith.constant 0 : i32
    %c0_i32_0 = arith.constant 0 : i32
    %c0_i32_1 = arith.constant 0 : i32
    return %c0_i32, %c0_i32_0 : i32, i32
  }
  func.func @transform_3(%arg0: i32) -> (i32, i32, i32) {
    %c0_i32 = arith.constant 0 : i32
    %c0_i32_0 = arith.constant 0 : i32
    %c0_i32_1 = arith.constant 0 : i32
    %c0_i32_2 = arith.constant 0 : i32
    return %c0_i32, %c0_i32_0, %c0_i32_1 : i32, i32, i32
  }
  func.func @transform_4(%arg0: i32) -> (i32, i32) {
    %c0_i32 = arith.constant 0 : i32
    %c0_i32_0 = arith.constant 0 : i32
    %c0_i32_1 = arith.constant 0 : i32
    return %c0_i32, %c0_i32_0 : i32, i32
  }
  func.func @transform_5(%arg0: i32) -> (i32, i32) {
    %c0_i32 = arith.constant 0 : i32
    %c0_i32_0 = arith.constant 0 : i32
    %c0_i32_1 = arith.constant 0 : i32
    return %c0_i32, %c0_i32_0 : i32, i32
  }
  func.func @transform_6(%arg0: i32) -> (i32, i32) {
    %c0_i32 = arith.constant 0 : i32
    %c0_i32_0 = arith.constant 0 : i32
    %c0_i32_1 = arith.constant 0 : i32
    return %c0_i32, %c0_i32_0 : i32, i32
  }
  func.func @transform_7(%arg0: i32) -> (i32, i32) {
    %c0_i32 = arith.constant 0 : i32
    %c0_i32_0 = arith.constant 0 : i32
    %c0_i32_1 = arith.constant 0 : i32
    return %c0_i32, %c0_i32_0 : i32, i32
  }
  func.func @transform_8(%arg0: i32) -> (i32, i32) {
    %c0_i32 = arith.constant 0 : i32
    %c0_i32_0 = arith.constant 0 : i32
    %c0_i32_1 = arith.constant 0 : i32
    return %c0_i32, %c0_i32_0 : i32, i32
  }
  func.func @transform_9(%arg0: i32) -> (i32, i32) {
    %c0_i32 = arith.constant 0 : i32
    %c0_i32_0 = arith.constant 0 : i32
    %c0_i32_1 = arith.constant 0 : i32
    return %c0_i32, %c0_i32_0 : i32, i32
  }
  func.func @transform_10(%arg0: i32) -> (i32, i32) {
    %c0_i32 = arith.constant 0 : i32
    %c0_i32_0 = arith.constant 0 : i32
    %c0_i32_1 = arith.constant 0 : i32
    return %c0_i32, %c0_i32_0 : i32, i32
  }
  func.func @transform_11(%arg0: i32) -> (i32, i32, i32) {
    %c0_i32 = arith.constant 0 : i32
    %c0_i32_0 = arith.constant 0 : i32
    %c0_i32_1 = arith.constant 0 : i32
    return %arg0, %c0_i32, %c0_i32_0 : i32, i32, i32
  }
}

</mosaic_0001>

<llo_original>
// kernel: tpu_custom_call.1
$region0: #{tpu_custom_call.1}
  #allocation0 [shape = 'u32[]', space=smem, size = 0x4, offset = 0x4, fixed_abs, tag = 'smem constant byte address 0x4 - core index']
  #allocation1 [shape = 'u32[144,128]{1,0:T(1,128)}', space=vmem, size = 0x12000, scoped, tag = 'internal scratch']
  %s0 = inlined_call_operand.hbm [shape: f32[2,16,128], index: 0, kind: input, shape index: {}]
  %s1 = inlined_call_operand.hbm [shape: bf16[128,128], index: 1, kind: input, shape index: {}]
  %s2 = inlined_call_operand.vmem [shape: f32[1,128], index: 2, kind: input, shape index: {}]
  %s3 = inlined_call_operand.hbm [shape: bf16[3,128,128], index: 3, kind: input, shape index: {}]
  %s4 = inlined_call_operand.vmem [shape: f32[1,128], index: 4, kind: input, shape index: {}]
  %s5 = inlined_call_operand.hbm [shape: bf16[128,128], index: 5, kind: input, shape index: {}]
  %s6 = inlined_call_operand.vmem [shape: f32[1,128], index: 6, kind: input, shape index: {}]
  %s7 = inlined_call_operand.hbm [shape: bf16[128,128], index: 7, kind: input, shape index: {}]
  %s8 = inlined_call_operand.vmem [shape: f32[1,128], index: 8, kind: input, shape index: {}]
  %s9 = inlined_call_operand.hbm [shape: bf16[128,128], index: 9, kind: input, shape index: {}]
  %s10 = inlined_call_operand.vmem [shape: f32[1,128], index: 10, kind: input, shape index: {}]
  %s11 = inlined_call_operand.hbm [shape: f32[2,16,128], index: 11, kind: output, shape index: {}]
  %s12 = sld [smem:[#allocation0]]
  $region101: #{tpu_custom_call.1} parent=0
    _
  %s14 = ssub.s32 1, %s12
  %s15 = scalar_select 0, %s14, %s12
  $region1: #{tpu_custom_call.1} parent=0
    #allocation2 [shape = 'u8[16384]{0}', space=vmem, size = 0x4000, scoped, tag = 'input window, operand 0']
    #allocation3 [shape = 's32[2]{0}', space=sflag, size = 0x8, scoped, tag = 'scoped memory for tpu_custom_call.1']
    #allocation4 [shape = 's32[2]{0}', space=sflag, size = 0x8, scoped, tag = 'scoped memory for tpu_custom_call.1']
    #allocation5 [shape = 'u8[32768]{0}', space=vmem, size = 0x8000, scoped, tag = 'input window, operand 1, single buffered']
    #allocation6 [shape = 's32[1]{0}', space=sflag, size = 0x4, scoped, tag = 'scoped memory for tpu_custom_call.1']
    #allocation7 [shape = 'u8[98304]{0}', space=vmem, size = 0x18000, scoped, tag = 'input window, operand 3, single buffered']
    #allocation8 [shape = 'u8[32768]{0}', space=vmem, size = 0x8000, scoped, tag = 'input window, operand 5, single buffered']
    #allocation9 [shape = 's32[1]{0}', space=sflag, size = 0x4, scoped, tag = 'scoped memory for tpu_custom_call.1']
    #allocation10 [shape = 'u8[32768]{0}', space=vmem, size = 0x8000, scoped, tag = 'input window, operand 7, single buffered']
    #allocation11 [shape = 'u8[32768]{0}', space=vmem, size = 0x8000, scoped, tag = 'input window, operand 9, single buffered']
    #allocation12 [shape = 's32[1]{0}', space=sflag, size = 0x4, scoped, tag = 'scoped memory for tpu_custom_call.1']
    #allocation13 [shape = 'u8[16384]{0}', space=vmem, size = 0x4000, scoped, tag = 'output window, operand 0']
    %16 = vsyncpa [#allocation3], 0
    %s17 = scalar_lea.sflag [#allocation3], 1
    %18 = vsyncpa %s17, 0
    %19 = vsyncpa [#allocation6], 0
    %20 = vsyncpa [#allocation9], 0
    %21 = vsyncpa [#allocation12], 0
    %22 = vsyncpa [#allocation4], 0
    %s23 = scalar_lea.sflag [#allocation4], 1
    %24 = vsyncpa %s23, 0
    loop: start=0, step=1, limit=4
    $region2: #{tpu_custom_call.1} parent=1 // loop_pre_header
      _
    $region3: #{tpu_custom_call.1} parent=1 // loop_header
      %s26 = sphi 0, %s30
      %p27 = scmp.ge.s32.totalorder %s26, 4
      %s36 = sphi 0, %s38
      %s39 = sphi 0, %s36
      %s40 = sphi 0, %s39
      %s56 = sphi 0, %s40
      %s60 = sphi 0, %s60
      %s62 = sphi 0, %s60
      %s63 = sphi 0, %s62
      %s77 = sphi 0, %s63
      %s81 = sphi 0, %s81
      %s83 = sphi 0, %s81
      %s84 = sphi 0, %s83
      %s98 = sphi 0, %s84
      %s102 = sphi 0, %s102
      %s104 = sphi 0, %s102
      %s105 = sphi 0, %s104
      %s119 = sphi 0, %s105
      %s123 = sphi 0, %s123
      %s125 = sphi 0, %s123
      %s126 = sphi 0, %s125
      %s140 = sphi 0, %s126
      %s144 = sphi 0, %s144
      %s146 = sphi 0, %s144
      %s147 = sphi 0, %s146
      %s161 = sphi 0, %s147
      %s165 = sphi 0, %s165
      %s167 = sphi 0, %s165
      %s168 = sphi 0, %s167
      %s182 = sphi 0, %s168
      %s186 = sphi 0, %s186
      %s188 = sphi 0, %s186
      %s189 = sphi 0, %s188
      %s203 = sphi 0, %s189
      %s207 = sphi 0, %s207
      %s209 = sphi 0, %s207
      %s210 = sphi 0, %s209
      %s224 = sphi 0, %s210
      %s228 = sphi 0, %s228
      %s230 = sphi 0, %s228
      %s231 = sphi 0, %s230
      %s245 = sphi 0, %s231
      %s249 = sphi 0, %s249
      %s251 = sphi 0, %s249
      %s252 = sphi 0, %s251
      %s266 = sphi 0, %s252
      %s272 = sphi 0, %s274
      %s275 = sphi 0, %s272
      %s276 = sphi 0, %s275
      %s292 = sphi 0, %s276
    $region4: #{tpu_custom_call.1} parent=1 // loop_header_branch
      %29 = sbr.rel (%p27) target = $region8
    $region5: #{tpu_custom_call.1} parent=1 // loop_body
      %s31 = ssub.s32 %s26, 1
      %s32 = ssub.s32 %s26, 2
      %s33 = sadd.s32 %s26, 1
      %s34 = ssub.s32 %s26, %s33
      %p35 = scmp.eq.s32.totalorder %s34, 0
      %s37 = sadd.s32 %s36, 1
      %s38 = scalar_select %p35, %s36, %s37
      %p41 = pneg %p35
      %p42 = scmp.eq.s32.totalorder %s26, 1
      %p43 = por %p41, %p42
      %p44 = scmp.ne.s32.totalorder %s36, %s39
      %p45 = scmp.eq.s32.totalorder %s26, 0
      %p46 = por %p44, %p45
      %p47 = scmp.ne.s32.totalorder %s36, %s39
      %p48 = scmp.eq.s32.totalorder %s31, 1
      %p49 = por %p47, %p48
      %p50 = scmp.ne.s32.totalorder %s39, %s40
      %p51 = scmp.eq.s32.totalorder %s31, 0
      %p52 = por %p50, %p51
      %p53 = scmp.ne.s32.totalorder %s39, %s40
      %p54 = scmp.eq.s32.totalorder %s32, 1
      %p55 = por %p53, %p54
      %p57 = scmp.ne.s32.totalorder %s40, %s56
      %p58 = scmp.eq.s32.totalorder %s32, 0
      %p59 = por %p57, %p58
      %s61 = sadd.s32 %s60, 1
      %p64 = scmp.eq.s32.totalorder %s26, 1
      %p65 = scmp.ne.s32.totalorder %s60, %s62
      %p66 = scmp.eq.s32.totalorder %s26, 0
      %p67 = por %p65, %p66
      %p68 = scmp.ne.s32.totalorder %s60, %s62
      %p69 = scmp.eq.s32.totalorder %s31, 1
      %p70 = por %p68, %p69
      %p71 = scmp.ne.s32.totalorder %s62, %s63
      %p72 = scmp.eq.s32.totalorder %s31, 0
      %p73 = por %p71, %p72
      %p74 = scmp.ne.s32.totalorder %s62, %s63
      %p75 = scmp.eq.s32.totalorder %s32, 1
      %p76 = por %p74, %p75
      %p78 = scmp.ne.s32.totalorder %s63, %s77
      %p79 = scmp.eq.s32.totalorder %s32, 0
      %p80 = por %p78, %p79
      %s82 = sadd.s32 %s81, 1
      %p85 = scmp.eq.s32.totalorder %s26, 1
      %p86 = scmp.ne.s32.totalorder %s81, %s83
      %p87 = scmp.eq.s32.totalorder %s26, 0
      %p88 = por %p86, %p87
      %p89 = scmp.ne.s32.totalorder %s81, %s83
      %p90 = scmp.eq.s32.totalorder %s31, 1
      %p91 = por %p89, %p90
      %p92 = scmp.ne.s32.totalorder %s83, %s84
      %p93 = scmp.eq.s32.totalorder %s31, 0
      %p94 = por %p92, %p93
      %p95 = scmp.ne.s32.totalorder %s83, %s84
      %p96 = scmp.eq.s32.totalorder %s32, 1
      %p97 = por %p95, %p96
      %p99 = scmp.ne.s32.totalorder %s84, %s98
      %p100 = scmp.eq.s32.totalorder %s32, 0
      %p101 = por %p99, %p100
      %s103 = sadd.s32 %s102, 1
      %p106 = scmp.eq.s32.totalorder %s26, 1
      %p107 = scmp.ne.s32.totalorder %s102, %s104
      %p108 = scmp.eq.s32.totalorder %s26, 0
      %p109 = por %p107, %p108
      %p110 = scmp.ne.s32.totalorder %s102, %s104
      %p111 = scmp.eq.s32.totalorder %s31, 1
      %p112 = por %p110, %p111
      %p113 = scmp.ne.s32.totalorder %s104, %s105
      %p114 = scmp.eq.s32.totalorder %s31, 0
      %p115 = por %p113, %p114
      %p116 = scmp.ne.s32.totalorder %s104, %s105
      %p117 = scmp.eq.s32.totalorder %s32, 1
      %p118 = por %p116, %p117
      %p120 = scmp.ne.s32.totalorder %s105, %s119
      %p121 = scmp.eq.s32.totalorder %s32, 0
      %p122 = por %p120, %p121
      %s124 = sadd.s32 %s123, 1
      %p127 = scmp.eq.s32.totalorder %s26, 1
      %p128 = scmp.ne.s32.totalorder %s123, %s125
      %p129 = scmp.eq.s32.totalorder %s26, 0
      %p130 = por %p128, %p129
      %p131 = scmp.ne.s32.totalorder %s123, %s125
      %p132 = scmp.eq.s32.totalorder %s31, 1
      %p133 = por %p131, %p132
      %p134 = scmp.ne.s32.totalorder %s125, %s126
      %p135 = scmp.eq.s32.totalorder %s31, 0
      %p136 = por %p134, %p135
      %p137 = scmp.ne.s32.totalorder %s125, %s126
      %p138 = scmp.eq.s32.totalorder %s32, 1
      %p139 = por %p137, %p138
      %p141 = scmp.ne.s32.totalorder %s126, %s140
      %p142 = scmp.eq.s32.totalorder %s32, 0
      %p143 = por %p141, %p142
      %s145 = sadd.s32 %s144, 1
      %p148 = scmp.eq.s32.totalorder %s26, 1
      %p149 = scmp.ne.s32.totalorder %s144, %s146
      %p150 = scmp.eq.s32.totalorder %s26, 0
      %p151 = por %p149, %p150
      %p152 = scmp.ne.s32.totalorder %s144, %s146
      %p153 = scmp.eq.s32.totalorder %s31, 1
      %p154 = por %p152, %p153
      %p155 = scmp.ne.s32.totalorder %s146, %s147
      %p156 = scmp.eq.s32.totalorder %s31, 0
      %p157 = por %p155, %p156
      %p158 = scmp.ne.s32.totalorder %s146, %s147
      %p159 = scmp.eq.s32.totalorder %s32, 1
      %p160 = por %p158, %p159
      %p162 = scmp.ne.s32.totalorder %s147, %s161
      %p163 = scmp.eq.s32.totalorder %s32, 0
      %p164 = por %p162, %p163
      %s166 = sadd.s32 %s165, 1
      %p169 = scmp.eq.s32.totalorder %s26, 1
      %p170 = scmp.ne.s32.totalorder %s165, %s167
      %p171 = scmp.eq.s32.totalorder %s26, 0
      %p172 = por %p170, %p171
      %p173 = scmp.ne.s32.totalorder %s165, %s167
      %p174 = scmp.eq.s32.totalorder %s31, 1
      %p175 = por %p173, %p174
      %p176 = scmp.ne.s32.totalorder %s167, %s168
      %p177 = scmp.eq.s32.totalorder %s31, 0
      %p178 = por %p176, %p177
      %p179 = scmp.ne.s32.totalorder %s167, %s168
      %p180 = scmp.eq.s32.totalorder %s32, 1
      %p181 = por %p179, %p180
      %p183 = scmp.ne.s32.totalorder %s168, %s182
      %p184 = scmp.eq.s32.totalorder %s32, 0
      %p185 = por %p183, %p184
      %s187 = sadd.s32 %s186, 1
      %p190 = scmp.eq.s32.totalorder %s26, 1
      %p191 = scmp.ne.s32.totalorder %s186, %s188
      %p192 = scmp.eq.s32.totalorder %s26, 0
      %p193 = por %p191, %p192
      %p194 = scmp.ne.s32.totalorder %s186, %s188
      %p195 = scmp.eq.s32.totalorder %s31, 1
      %p196 = por %p194, %p195
      %p197 = scmp.ne.s32.totalorder %s188, %s189
      %p198 = scmp.eq.s32.totalorder %s31, 0
      %p199 = por %p197, %p198
      %p200 = scmp.ne.s32.totalorder %s188, %s189
      %p201 = scmp.eq.s32.totalorder %s32, 1
      %p202 = por %p200, %p201
      %p204 = scmp.ne.s32.totalorder %s189, %s203
      %p205 = scmp.eq.s32.totalorder %s32, 0
      %p206 = por %p204, %p205
      %s208 = sadd.s32 %s207, 1
      %p211 = scmp.eq.s32.totalorder %s26, 1
      %p212 = scmp.ne.s32.totalorder %s207, %s209
      %p213 = scmp.eq.s32.totalorder %s26, 0
      %p214 = por %p212, %p213
      %p215 = scmp.ne.s32.totalorder %s207, %s209
      %p216 = scmp.eq.s32.totalorder %s31, 1
      %p217 = por %p215, %p216
      %p218 = scmp.ne.s32.totalorder %s209, %s210
      %p219 = scmp.eq.s32.totalorder %s31, 0
      %p220 = por %p218, %p219
      %p221 = scmp.ne.s32.totalorder %s209, %s210
      %p222 = scmp.eq.s32.totalorder %s32, 1
      %p223 = por %p221, %p222
      %p225 = scmp.ne.s32.totalorder %s210, %s224
      %p226 = scmp.eq.s32.totalorder %s32, 0
      %p227 = por %p225, %p226
      %s229 = sadd.s32 %s228, 1
      %p232 = scmp.eq.s32.totalorder %s26, 1
      %p233 = scmp.ne.s32.totalorder %s228, %s230
      %p234 = scmp.eq.s32.totalorder %s26, 0
      %p235 = por %p233, %p234
      %p236 = scmp.ne.s32.totalorder %s228, %s230
      %p237 = scmp.eq.s32.totalorder %s31, 1
      %p238 = por %p236, %p237
      %p239 = scmp.ne.s32.totalorder %s230, %s231
      %p240 = scmp.eq.s32.totalorder %s31, 0
      %p241 = por %p239, %p240
      %p242 = scmp.ne.s32.totalorder %s230, %s231
      %p243 = scmp.eq.s32.totalorder %s32, 1
      %p244 = por %p242, %p243
      %p246 = scmp.ne.s32.totalorder %s231, %s245
      %p247 = scmp.eq.s32.totalorder %s32, 0
      %p248 = por %p246, %p247
      %s250 = sadd.s32 %s249, 1
      %p253 = scmp.eq.s32.totalorder %s26, 1
      %p254 = scmp.ne.s32.totalorder %s249, %s251
      %p255 = scmp.eq.s32.totalorder %s26, 0
      %p256 = por %p254, %p255
      %p257 = scmp.ne.s32.totalorder %s249, %s251
      %p258 = scmp.eq.s32.totalorder %s31, 1
      %p259 = por %p257, %p258
      %p260 = scmp.ne.s32.totalorder %s251, %s252
      %p261 = scmp.eq.s32.totalorder %s31, 0
      %p262 = por %p260, %p261
      %p263 = scmp.ne.s32.totalorder %s251, %s252
      %p264 = scmp.eq.s32.totalorder %s32, 1
      %p265 = por %p263, %p264
      %p267 = scmp.ne.s32.totalorder %s252, %s266
      %p268 = scmp.eq.s32.totalorder %s32, 0
      %p269 = por %p267, %p268
      %s270 = ssub.s32 %s26, %s33
      %p271 = scmp.eq.s32.totalorder %s270, 0
      %s273 = sadd.s32 %s272, 1
      %s274 = scalar_select %p271, %s272, %s273
      %p277 = pneg %p271
      %p278 = scmp.eq.s32.totalorder %s26, 1
      %p279 = por %p277, %p278
      %p280 = scmp.ne.s32.totalorder %s272, %s275
      %p281 = scmp.eq.s32.totalorder %s26, 0
      %p282 = por %p280, %p281
      %p283 = scmp.ne.s32.totalorder %s272, %s275
      %p284 = scmp.eq.s32.totalorder %s31, 1
      %p285 = por %p283, %p284
      %p286 = scmp.ne.s32.totalorder %s275, %s276
      %p287 = scmp.eq.s32.totalorder %s31, 0
      %p288 = por %p286, %p287
      %p289 = scmp.ne.s32.totalorder %s275, %s276
      %p290 = scmp.eq.s32.totalorder %s32, 1
      %p291 = por %p289, %p290
      %p293 = scmp.ne.s32.totalorder %s276, %s292
      %p294 = scmp.eq.s32.totalorder %s32, 0
      %p295 = por %p293, %p294
      %p296 = scmp.le.s32.totalorder 1, %s26
      %p297 = scmp.lt.s32.totalorder %s26, 3
      %p298 = pnand %p296, %p297
      %p299 = pneg %p298
      // Predicated region
      $region9: #{tpu_custom_call.1} parent=5 // pred_check
        _
      $region10: #{tpu_custom_call.1} parent=5 // pred_check_branch
        %301 = sbr.rel (%p298) target = $region12
      $region11: #{tpu_custom_call.1} parent=5 // pred_region
        %s302 = ssub.s32 %s26, 1
        // Predicated region
        $region13: #{tpu_custom_call.1} parent=11 // pred_check
          %p303 = pneg %p73
        $region14: #{tpu_custom_call.1} parent=11 // pred_check_branch
          %305 = sbr.rel (%p303) target = $region16
        $region15: #{tpu_custom_call.1} parent=11 // pred_region
          %s307 = ssub.s32 1024, 1024
          %308 = vsyncadd [#allocation6], %s307
          %s309 = sshll.u32 [#allocation5], 4
          %s310 = int_to_ptr.vmem [resolvable:$true] %s309
          %315 = dma.hbm_to_vmem [thread:$0]  %s1, 1024, %s310, [#allocation6], 64, 64, 4
        $region16: #{tpu_custom_call.1} parent=11 // pred_fallthru
          _
        // Predicated region
        $region17: #{tpu_custom_call.1} parent=11 // pred_check
          %p316 = pneg %p94
        $region18: #{tpu_custom_call.1} parent=11 // pred_check_branch
          %318 = sbr.rel (%p316) target = $region20
        $region19: #{tpu_custom_call.1} parent=11 // pred_region
          _
        $region20: #{tpu_custom_call.1} parent=11 // pred_fallthru
          _
        // Predicated region
        $region21: #{tpu_custom_call.1} parent=11 // pred_check
          %p319 = pneg %p115
        $region22: #{tpu_custom_call.1} parent=11 // pred_check_branch
          %321 = sbr.rel (%p319) target = $region24
        $region23: #{tpu_custom_call.1} parent=11 // pred_region
          %s323 = ssub.s32 3072, 3072
          %324 = vsyncadd [#allocation6], %s323
          %s325 = sshll.u32 [#allocation7], 4
          %s326 = int_to_ptr.vmem [resolvable:$true] %s325
          %331 = dma.hbm_to_vmem [thread:$0]  %s3, 3072, %s326, [#allocation6], 64, 64, 4
        $region24: #{tpu_custom_call.1} parent=11 // pred_fallthru
          _
        // Predicated region
        $region25: #{tpu_custom_call.1} parent=11 // pred_check
          %p332 = pneg %p136
        $region26: #{tpu_custom_call.1} parent=11 // pred_check_branch
          %334 = sbr.rel (%p332) target = $region28
        $region27: #{tpu_custom_call.1} parent=11 // pred_region
          _
        $region28: #{tpu_custom_call.1} parent=11 // pred_fallthru
          _
        // Predicated region
        $region29: #{tpu_custom_call.1} parent=11 // pred_check
          %p335 = pneg %p157
        $region30: #{tpu_custom_call.1} parent=11 // pred_check_branch
          %337 = sbr.rel (%p335) target = $region32
        $region31: #{tpu_custom_call.1} parent=11 // pred_region
          %s339 = ssub.s32 1024, 1024
          %340 = vsyncadd [#allocation9], %s339
          %s341 = sshll.u32 [#allocation8], 4
          %s342 = int_to_ptr.vmem [resolvable:$true] %s341
          %347 = dma.hbm_to_vmem [thread:$0]  %s5, 1024, %s342, [#allocation9], 64, 64, 4
        $region32: #{tpu_custom_call.1} parent=11 // pred_fallthru
          _
        // Predicated region
        $region33: #{tpu_custom_call.1} parent=11 // pred_check
          %p348 = pneg %p178
        $region34: #{tpu_custom_call.1} parent=11 // pred_check_branch
          %350 = sbr.rel (%p348) target = $region36
        $region35: #{tpu_custom_call.1} parent=11 // pred_region
          _
        $region36: #{tpu_custom_call.1} parent=11 // pred_fallthru
          _
        // Predicated region
        $region37: #{tpu_custom_call.1} parent=11 // pred_check
          %p351 = pneg %p199
        $region38: #{tpu_custom_call.1} parent=11 // pred_check_branch
          %353 = sbr.rel (%p351) target = $region40
        $region39: #{tpu_custom_call.1} parent=11 // pred_region
          %s355 = ssub.s32 1024, 1024
          %356 = vsyncadd [#allocation9], %s355
          %s357 = sshll.u32 [#allocation10], 4
          %s358 = int_to_ptr.vmem [resolvable:$true] %s357
          %363 = dma.hbm_to_vmem [thread:$0]  %s7, 1024, %s358, [#allocation9], 64, 64, 4
        $region40: #{tpu_custom_call.1} parent=11 // pred_fallthru
          _
        // Predicated region
        $region41: #{tpu_custom_call.1} parent=11 // pred_check
          %p364 = pneg %p220
        $region42: #{tpu_custom_call.1} parent=11 // pred_check_branch
          %366 = sbr.rel (%p364) target = $region44
        $region43: #{tpu_custom_call.1} parent=11 // pred_region
          _
        $region44: #{tpu_custom_call.1} parent=11 // pred_fallthru
          _
        // Predicated region
        $region45: #{tpu_custom_call.1} parent=11 // pred_check
          %p367 = pneg %p241
        $region46: #{tpu_custom_call.1} parent=11 // pred_check_branch
          %369 = sbr.rel (%p367) target = $region48
        $region47: #{tpu_custom_call.1} parent=11 // pred_region
          %s371 = ssub.s32 1024, 1024
          %372 = vsyncadd [#allocation12], %s371
          %s373 = sshll.u32 [#allocation11], 4
          %s374 = int_to_ptr.vmem [resolvable:$true] %s373
          %379 = dma.hbm_to_vmem [thread:$0]  %s9, 1024, %s374, [#allocation12], 64, 64, 4
        $region48: #{tpu_custom_call.1} parent=11 // pred_fallthru
          _
        // Predicated region
        $region49: #{tpu_custom_call.1} parent=11 // pred_check
          %p380 = pneg %p262
        $region50: #{tpu_custom_call.1} parent=11 // pred_check_branch
          %382 = sbr.rel (%p380) target = $region52
        $region51: #{tpu_custom_call.1} parent=11 // pred_region
          _
        $region52: #{tpu_custom_call.1} parent=11 // pred_fallthru
          _
      $region12: #{tpu_custom_call.1} parent=5 // pred_fallthru
        _
      %p383 = scmp.lt.s32.totalorder %s26, 2
      // Predicated region
      $region53: #{tpu_custom_call.1} parent=5 // pred_check
        %p384 = pneg %p383
      $region54: #{tpu_custom_call.1} parent=5 // pred_check_branch
        %386 = sbr.rel (%p384) target = $region56
      $region55: #{tpu_custom_call.1} parent=5 // pred_region
        // Predicated region
        $region57: #{tpu_custom_call.1} parent=55 // pred_check
          %p387 = pneg %p46
        $region58: #{tpu_custom_call.1} parent=55 // pred_check_branch
          %389 = sbr.rel (%p387) target = $region60
        $region59: #{tpu_custom_call.1} parent=55 // pred_region
          %s390 = sand.u32 %s36, 1
          %s391 = scalar_lea.sflag [#allocation3], %s390
          %s392 = sand.u32 %s36, 1
          %s393 = smul.addr %s392, 16
          %s394 = scalar_lea.vmem [#allocation2], %s393
          %s396 = ssub.s32 256, 256
          %397 = vsyncadd %s391, %s396
          %s398 = smul.addr %s26, 2
          %s399 = smul.addr %s398, 128
          %s400 = scalar_lea.hbm %s0, %s399
          %s401 = sshll.u32 %s394, 4
          %s402 = int_to_ptr.vmem [resolvable:$true] %s401
          %407 = dma.hbm_to_vmem [thread:$0]  %s400, 256, %s402, %s391, 128, 128, 8
        $region60: #{tpu_custom_call.1} parent=55 // pred_fallthru
          _
      $region56: #{tpu_custom_call.1} parent=5 // pred_fallthru
        _
      %p408 = scmp.le.s32.totalorder 1, %s26
      %p409 = scmp.lt.s32.totalorder %s26, 3
      %p410 = pnand %p408, %p409
      %p411 = pneg %p410
      // Predicated region
      $region61: #{tpu_custom_call.1} parent=5 // pred_check
        _
      $region62: #{tpu_custom_call.1} parent=5 // pred_check_branch
        %413 = sbr.rel (%p410) target = $region64
      $region63: #{tpu_custom_call.1} parent=5 // pred_region
        %s414 = ssub.s32 %s26, 1
        %s415 = sand.u32 %s39, 1
        %s416 = scalar_lea.sflag [#allocation3], %s415
        %s417 = sand.u32 %s39, 1
        %s418 = smul.addr %s417, 16
        %s419 = scalar_lea.vmem [#allocation2], %s418
        // Predicated region
        $region65: #{tpu_custom_call.1} parent=63 // pred_check
          %p420 = pneg %p52
        $region66: #{tpu_custom_call.1} parent=63 // pred_check_branch
          %422 = sbr.rel (%p420) target = $region68
        $region67: #{tpu_custom_call.1} parent=63 // pred_region
          %423 = dma.done %s416, 256
        $region68: #{tpu_custom_call.1} parent=63 // pred_fallthru
          _
        // Predicated region
        $region69: #{tpu_custom_call.1} parent=63 // pred_check
          %p424 = pneg %p73
        $region70: #{tpu_custom_call.1} parent=63 // pred_check_branch
          %426 = sbr.rel (%p424) target = $region72
        $region71: #{tpu_custom_call.1} parent=63 // pred_region
          %427 = dma.done [#allocation6], 1024
        $region72: #{tpu_custom_call.1} parent=63 // pred_fallthru
          _
        // Predicated region
        $region73: #{tpu_custom_call.1} parent=63 // pred_check
          %p428 = pneg %p115
        $region74: #{tpu_custom_call.1} parent=63 // pred_check_branch
          %430 = sbr.rel (%p428) target = $region76
        $region75: #{tpu_custom_call.1} parent=63 // pred_region
          %431 = dma.done [#allocation6], 3072
        $region76: #{tpu_custom_call.1} parent=63 // pred_fallthru
          _
        // Predicated region
        $region77: #{tpu_custom_call.1} parent=63 // pred_check
          %p432 = pneg %p157
        $region78: #{tpu_custom_call.1} parent=63 // pred_check_branch
          %434 = sbr.rel (%p432) target = $region80
        $region79: #{tpu_custom_call.1} parent=63 // pred_region
          %435 = dma.done [#allocation9], 1024
        $region80: #{tpu_custom_call.1} parent=63 // pred_fallthru
          _
        // Predicated region
        $region81: #{tpu_custom_call.1} parent=63 // pred_check
          %p436 = pneg %p199
        $region82: #{tpu_custom_call.1} parent=63 // pred_check_branch
          %438 = sbr.rel (%p436) target = $region84
        $region83: #{tpu_custom_call.1} parent=63 // pred_region
          %439 = dma.done [#allocation9], 1024
        $region84: #{tpu_custom_call.1} parent=63 // pred_fallthru
          _
        // Predicated region
        $region85: #{tpu_custom_call.1} parent=63 // pred_check
          %p440 = pneg %p241
        $region86: #{tpu_custom_call.1} parent=63 // pred_check_branch
          %442 = sbr.rel (%p440) target = $region88
        $region87: #{tpu_custom_call.1} parent=63 // pred_region
          %443 = dma.done [#allocation12], 1024
        $region88: #{tpu_custom_call.1} parent=63 // pred_fallthru
          _
        %s444 = sand.u32 %s39, 1
        %s445 = scalar_lea.sflag [#allocation3], %s444
        %s446 = sand.u32 %s39, 1
        %s447 = smul.addr %s446, 16
        %s448 = scalar_lea.vmem [#allocation2], %s447
        %p449 = pneg %p52
        %p450 = pneg %p49
        %p451 = pneg %p73
        %p452 = pneg %p70
        %p453 = pneg %p94
        %p454 = pneg %p91
        %p455 = pneg %p115
        %p456 = pneg %p112
        %p457 = pneg %p136
        %p458 = pneg %p133
        %p459 = pneg %p157
        %p460 = pneg %p154
        %p461 = pneg %p178
        %p462 = pneg %p175
        %p463 = pneg %p199
        %p464 = pneg %p196
        %p465 = pneg %p220
        %p466 = pneg %p217
        %p467 = pneg %p241
        %p468 = pneg %p238
        %p469 = pneg %p262
        %p470 = pneg %p259
        %p471 = pneg %p288
        %p472 = pneg %p285
        %s473 = sand.u32 %s275, 1
        %s474 = scalar_lea.sflag [#allocation4], %s473
        %s475 = sand.u32 %s275, 1
        %s476 = smul.addr %s475, 16
        %s477 = scalar_lea.vmem [#allocation13], %s476
        %v479 = vld [vmem:[%s419] sm:$0xff]
        %v480 = vld [vmem:[%s419 + $0x8] sm:$0xff]
        %v481 = vpack.c.bf16 %v480, %v479
        %v482 = vld [vmem:[#allocation5] sm:$0xf]
        %v483 = vld [vmem:[#allocation5 + $0x4] sm:$0xf]
        %v484 = vld [vmem:[#allocation5 + $0x8] sm:$0xf]
        %v485 = vld [vmem:[#allocation5 + $0xc] sm:$0xf]
        %v486 = vld [vmem:[#allocation5 + $0x10] sm:$0xf]
        %v487 = vld [vmem:[#allocation5 + $0x14] sm:$0xf]
        %v488 = vld [vmem:[#allocation5 + $0x18] sm:$0xf]
        %v489 = vld [vmem:[#allocation5 + $0x1c] sm:$0xf]
        %v490 = vld [vmem:[#allocation5 + $0x20] sm:$0xf]
        %v491 = vld [vmem:[#allocation5 + $0x24] sm:$0xf]
        %v492 = vld [vmem:[#allocation5 + $0x28] sm:$0xf]
        %v493 = vld [vmem:[#allocation5 + $0x2c] sm:$0xf]
        %v494 = vld [vmem:[#allocation5 + $0x30] sm:$0xf]
        %v495 = vld [vmem:[#allocation5 + $0x34] sm:$0xf]
        %v496 = vld [vmem:[#allocation5 + $0x38] sm:$0xf]
        %v497 = vld [vmem:[#allocation5 + $0x3c] sm:$0xf]
        %v498 = vld [vmem:[%s2] sm:$0x1]
        %v500 = vlaneseq
        %v501 = vshrl.u32 %v500, 7
        %v502 = vsub.s32 0, %v501
        %v503 = vrot.slane %v498, %v502
        %v521 = vunpack.c.l.b16 %v482
        %v522 = vunpack.c.l.b16 %v483
        %v523 = vunpack.c.l.b16 %v484
        %v524 = vunpack.c.l.b16 %v485
        %v525 = vunpack.c.l.b16 %v486
        %v526 = vunpack.c.l.b16 %v487
        %v527 = vunpack.c.l.b16 %v488
        %v528 = vunpack.c.l.b16 %v489
        %v529 = vunpack.c.l.b16 %v490
        %v530 = vunpack.c.l.b16 %v491
        %v531 = vunpack.c.l.b16 %v492
        %v532 = vunpack.c.l.b16 %v493
        %v533 = vunpack.c.l.b16 %v494
        %v534 = vunpack.c.l.b16 %v495
        %v535 = vunpack.c.l.b16 %v496
        %v536 = vunpack.c.l.b16 %v497
        %v537 = vpack.c.b16 %v522, %v521
        %v538 = vpack.c.b16 %v524, %v523
        %v539 = vpack.c.b16 %v526, %v525
        %v540 = vpack.c.b16 %v528, %v527
        %v541 = vpack.c.b16 %v530, %v529
        %v542 = vpack.c.b16 %v532, %v531
        %v543 = vpack.c.b16 %v534, %v533
        %v544 = vpack.c.b16 %v536, %v535
        %553 = vmatprep.subr.bf16.mxu0 0
        %554 = vmatpush1.bf16.msra.mxu0 %v537
        %555 = vmatprep.subr.bf16.mxu0 0
        %556 = vmatpush1.bf16.msra.mxu0 %v538
        %557 = vmatprep.subr.bf16.mxu0 0
        %558 = vmatpush1.bf16.msra.mxu0 %v539
        %559 = vmatprep.subr.bf16.mxu0 0
        %560 = vmatpush1.bf16.msra.mxu0 %v540
        %561 = vmatprep.subr.bf16.mxu0 0
        %562 = vmatpush1.bf16.msra.mxu0 %v541
        %563 = vmatprep.subr.bf16.mxu0 0
        %564 = vmatpush1.bf16.msra.mxu0 %v542
        %565 = vmatprep.subr.bf16.mxu0 0
        %566 = vmatpush1.bf16.msra.mxu0 %v543
        %567 = vmatprep.subr.bf16.mxu0 0
        %568 = vmatpush1.bf16.msra.mxu0 %v544
        %569 = vmatprep.subr.bf16.mxu0 0
        %570 = vmatpush1.bf16.msra.mxu0 0
        %571 = vmatprep.subr.bf16.mxu0 0
        %572 = vmatpush1.bf16.msra.mxu0 0
        %573 = vmatprep.subr.bf16.mxu0 0
        %574 = vmatpush1.bf16.msra.mxu0 0
        %575 = vmatprep.subr.bf16.mxu0 0
        %576 = vmatpush1.bf16.msra.mxu0 0
        %577 = vmatprep.subr.bf16.mxu0 0
        %578 = vmatpush1.bf16.msra.mxu0 0
        %579 = vmatprep.subr.bf16.mxu0 0
        %580 = vmatpush1.bf16.msra.mxu0 0
        %581 = vmatprep.subr.bf16.mxu0 0
        %582 = vmatpush1.bf16.msra.mxu0 0
        %583 = vmatprep.subr.bf16.mxu0 0
        %584 = vmatpush1.bf16.msra.mxu0 0
        %585 = vmatprep.mubr.bf16.mxu0 0
        %586 = vmatmul.mubr.bf16.gmra.mrb[0].mxu0 %v481
        %v587 = vpop.f32.mrb[0].mxu0
        %v588 = vadd.f32 %v503, %v587
        %v589 = vpop.f32.mrb[0].mxu0
        %v590 = vpop.f32.mrb[0].mxu0
        %v591 = vadd.f32 %v503, %v590
        %v592 = vpop.f32.mrb[0].mxu0
        %593 = vdwg.mxu0
        %v594 = vmax.f32 %v588, 0.0
        %v595 = vmax.f32 %v591, 0.0
        %v596 = vlaneseq
        %v597 = vshrl.u32 %v596, 7
        %v598 = vadd.s32 %v597, 8
        %vm599 = vcmp.ne.s32.totalorder %v597, 0
        %vm600 = vcmp.ne.s32.totalorder %v598, 0
        %v601 = vrot.slane %v594, 7
        %v602 = vrot.slane %v595, 7
        %vm603 = vcmp.lt.s32.totalorder %v597, 1
        %v604 = vsel %vm603, %v601, %v602
        %v605 = vsel %vm603, %v602, %v601
        %v606 = vsel %vm599, 1, 0
        %v607 = vsel %vm600, 1, 0
        %vm608 = vcmp.eq.s32.totalorder %v606, 1
        %vm609 = vcmp.eq.s32.totalorder %v607, 1
        %v610 = vsel %vm608, %v605, 0.0
        %v611 = vsel %vm609, %v604, 0.0
        %vm612 = vcmp.ne.s32.totalorder %v597, 15
        %vm613 = vcmp.ne.s32.totalorder %v598, 15
        %v614 = vrot.slane %v594, 1
        %v615 = vrot.slane %v595, 1
        %vm616 = vcmp.lt.s32.totalorder %v597, 7
        %v617 = vsel %vm616, %v614, %v615
        %v618 = vsel %vm616, %v615, %v614
        %v619 = vsel %vm612, 1, 0
        %v620 = vsel %vm613, 1, 0
        %vm621 = vcmp.eq.s32.totalorder %v619, 1
        %vm622 = vcmp.eq.s32.totalorder %v620, 1
        %v623 = vsel %vm621, %v617, 0.0
        %v624 = vsel %vm622, %v618, 0.0
        %v625 = vpack.c.bf16 %v611, %v610
        %v626 = vld [vmem:[#allocation7] sm:$0xf]
        %v627 = vld [vmem:[#allocation7 + $0x4] sm:$0xf]
        %v628 = vld [vmem:[#allocation7 + $0x8] sm:$0xf]
        %v629 = vld [vmem:[#allocation7 + $0xc] sm:$0xf]
        %v630 = vld [vmem:[#allocation7 + $0x10] sm:$0xf]
        %v631 = vld [vmem:[#allocation7 + $0x14] sm:$0xf]
        %v632 = vld [vmem:[#allocation7 + $0x18] sm:$0xf]
        %v633 = vld [vmem:[#allocation7 + $0x1c] sm:$0xf]
        %v634 = vld [vmem:[#allocation7 + $0x20] sm:$0xf]
        %v635 = vld [vmem:[#allocation7 + $0x24] sm:$0xf]
        %v636 = vld [vmem:[#allocation7 + $0x28] sm:$0xf]
        %v637 = vld [vmem:[#allocation7 + $0x2c] sm:$0xf]
        %v638 = vld [vmem:[#allocation7 + $0x30] sm:$0xf]
        %v639 = vld [vmem:[#allocation7 + $0x34] sm:$0xf]
        %v640 = vld [vmem:[#allocation7 + $0x38] sm:$0xf]
        %v641 = vld [vmem:[#allocation7 + $0x3c] sm:$0xf]
        %v642 = vpack.c.bf16 %v595, %v594
        %s643 = scalar_lea.vmem [#allocation7], 64
        %v644 = vld [vmem:[%s643] sm:$0xf]
        %v645 = vld [vmem:[%s643 + $0x4] sm:$0xf]
        %v646 = vld [vmem:[%s643 + $0x8] sm:$0xf]
        %v647 = vld [vmem:[%s643 + $0xc] sm:$0xf]
        %v648 = vld [vmem:[%s643 + $0x10] sm:$0xf]
        %v649 = vld [vmem:[%s643 + $0x14] sm:$0xf]
        %v650 = vld [vmem:[%s643 + $0x18] sm:$0xf]
        %v651 = vld [vmem:[%s643 + $0x1c] sm:$0xf]
        %v652 = vld [vmem:[%s643 + $0x20] sm:$0xf]
        %v653 = vld [vmem:[%s643 + $0x24] sm:$0xf]
        %v654 = vld [vmem:[%s643 + $0x28] sm:$0xf]
        %v655 = vld [vmem:[%s643 + $0x2c] sm:$0xf]
        %v656 = vld [vmem:[%s643 + $0x30] sm:$0xf]
        %v657 = vld [vmem:[%s643 + $0x34] sm:$0xf]
        %v658 = vld [vmem:[%s643 + $0x38] sm:$0xf]
        %v659 = vld [vmem:[%s643 + $0x3c] sm:$0xf]
        %v676 = vunpack.c.l.b16 %v644
        %v677 = vunpack.c.l.b16 %v645
        %v678 = vunpack.c.l.b16 %v646
        %v679 = vunpack.c.l.b16 %v647
        %v680 = vunpack.c.l.b16 %v648
        %v681 = vunpack.c.l.b16 %v649
        %v682 = vunpack.c.l.b16 %v650
        %v683 = vunpack.c.l.b16 %v651
        %v684 = vunpack.c.l.b16 %v652
        %v685 = vunpack.c.l.b16 %v653
        %v686 = vunpack.c.l.b16 %v654
        %v687 = vunpack.c.l.b16 %v655
        %v688 = vunpack.c.l.b16 %v656
        %v689 = vunpack.c.l.b16 %v657
        %v690 = vunpack.c.l.b16 %v658
        %v691 = vunpack.c.l.b16 %v659
        %v692 = vpack.c.b16 %v677, %v676
        %v693 = vpack.c.b16 %v679, %v678
        %v694 = vpack.c.b16 %v681, %v680
        %v695 = vpack.c.b16 %v683, %v682
        %v696 = vpack.c.b16 %v685, %v684
        %v697 = vpack.c.b16 %v687, %v686
        %v698 = vpack.c.b16 %v689, %v688
        %v699 = vpack.c.b16 %v691, %v690
        %708 = vmatprep.subr.bf16.mxu0 0
        %709 = vmatpush1.bf16.msra.mxu0 %v692
        %710 = vmatprep.subr.bf16.mxu0 0
        %711 = vmatpush1.bf16.msra.mxu0 %v693
        %712 = vmatprep.subr.bf16.mxu0 0
        %713 = vmatpush1.bf16.msra.mxu0 %v694
        %714 = vmatprep.subr.bf16.mxu0 0
        %715 = vmatpush1.bf16.msra.mxu0 %v695
        %716 = vmatprep.subr.bf16.mxu0 0
        %717 = vmatpush1.bf16.msra.mxu0 %v696
        %718 = vmatprep.subr.bf16.mxu0 0
        %719 = vmatpush1.bf16.msra.mxu0 %v697
        %720 = vmatprep.subr.bf16.mxu0 0
        %721 = vmatpush1.bf16.msra.mxu0 %v698
        %722 = vmatprep.subr.bf16.mxu0 0
        %723 = vmatpush1.bf16.msra.mxu0 %v699
        %724 = vmatprep.subr.bf16.mxu0 0
        %725 = vmatpush1.bf16.msra.mxu0 0
        %726 = vmatprep.subr.bf16.mxu0 0
        %727 = vmatpush1.bf16.msra.mxu0 0
        %728 = vmatprep.subr.bf16.mxu0 0
        %729 = vmatpush1.bf16.msra.mxu0 0
        %730 = vmatprep.subr.bf16.mxu0 0
        %731 = vmatpush1.bf16.msra.mxu0 0
        %732 = vmatprep.subr.bf16.mxu0 0
        %733 = vmatpush1.bf16.msra.mxu0 0
        %734 = vmatprep.subr.bf16.mxu0 0
        %735 = vmatpush1.bf16.msra.mxu0 0
        %736 = vmatprep.subr.bf16.mxu0 0
        %737 = vmatpush1.bf16.msra.mxu0 0
        %738 = vmatprep.subr.bf16.mxu0 0
        %739 = vmatpush1.bf16.msra.mxu0 0
        %740 = vmatprep.mubr.bf16.mxu0 0
        %741 = vmatmul.mubr.bf16.gmra.mrb[0].mxu0 %v642
        %v742 = vpop.f32.mrb[0].mxu0
        %v743 = vadd.f32 0.0, %v742
        %v744 = vpop.f32.mrb[0].mxu0
        %v745 = vpop.f32.mrb[0].mxu0
        %v746 = vadd.f32 0.0, %v745
        %v747 = vpop.f32.mrb[0].mxu0
        %748 = vdwg.mxu0
        %v765 = vunpack.c.l.b16 %v626
        %v766 = vunpack.c.l.b16 %v627
        %v767 = vunpack.c.l.b16 %v628
        %v768 = vunpack.c.l.b16 %v629
        %v769 = vunpack.c.l.b16 %v630
        %v770 = vunpack.c.l.b16 %v631
        %v771 = vunpack.c.l.b16 %v632
        %v772 = vunpack.c.l.b16 %v633
        %v773 = vunpack.c.l.b16 %v634
        %v774 = vunpack.c.l.b16 %v635
        %v775 = vunpack.c.l.b16 %v636
        %v776 = vunpack.c.l.b16 %v637
        %v777 = vunpack.c.l.b16 %v638
        %v778 = vunpack.c.l.b16 %v639
        %v779 = vunpack.c.l.b16 %v640
        %v780 = vunpack.c.l.b16 %v641
        %v781 = vpack.c.b16 %v766, %v765
        %v782 = vpack.c.b16 %v768, %v767
        %v783 = vpack.c.b16 %v770, %v769
        %v784 = vpack.c.b16 %v772, %v771
        %v785 = vpack.c.b16 %v774, %v773
        %v786 = vpack.c.b16 %v776, %v775
        %v787 = vpack.c.b16 %v778, %v777
        %v788 = vpack.c.b16 %v780, %v779
        %797 = vmatprep.subr.bf16.mxu0 0
        %798 = vmatpush1.bf16.msra.mxu0 %v781
        %799 = vmatprep.subr.bf16.mxu0 0
        %800 = vmatpush1.bf16.msra.mxu0 %v782
        %801 = vmatprep.subr.bf16.mxu0 0
        %802 = vmatpush1.bf16.msra.mxu0 %v783
        %803 = vmatprep.subr.bf16.mxu0 0
        %804 = vmatpush1.bf16.msra.mxu0 %v784
        %805 = vmatprep.subr.bf16.mxu0 0
        %806 = vmatpush1.bf16.msra.mxu0 %v785
        %807 = vmatprep.subr.bf16.mxu0 0
        %808 = vmatpush1.bf16.msra.mxu0 %v786
        %809 = vmatprep.subr.bf16.mxu0 0
        %810 = vmatpush1.bf16.msra.mxu0 %v787
        %811 = vmatprep.subr.bf16.mxu0 0
        %812 = vmatpush1.bf16.msra.mxu0 %v788
        %813 = vmatprep.subr.bf16.mxu0 0
        %814 = vmatpush1.bf16.msra.mxu0 0
        %815 = vmatprep.subr.bf16.mxu0 0
        %816 = vmatpush1.bf16.msra.mxu0 0
        %817 = vmatprep.subr.bf16.mxu0 0
        %818 = vmatpush1.bf16.msra.mxu0 0
        %819 = vmatprep.subr.bf16.mxu0 0
        %820 = vmatpush1.bf16.msra.mxu0 0
        %821 = vmatprep.subr.bf16.mxu0 0
        %822 = vmatpush1.bf16.msra.mxu0 0
        %823 = vmatprep.subr.bf16.mxu0 0
        %824 = vmatpush1.bf16.msra.mxu0 0
        %825 = vmatprep.subr.bf16.mxu0 0
        %826 = vmatpush1.bf16.msra.mxu0 0
        %827 = vmatprep.subr.bf16.mxu0 0
        %828 = vmatpush1.bf16.msra.mxu0 0
        %829 = vmatprep.mubr.bf16.mxu0 0
        %830 = vmatmul.mubr.bf16.gmra.mrb[0].mxu0 %v625
        %v831 = vpop.f32.mrb[0].mxu0
        %v832 = vadd.f32 %v743, %v831
        %v833 = vpop.f32.mrb[0].mxu0
        %v834 = vpop.f32.mrb[0].mxu0
        %v835 = vadd.f32 %v746, %v834
        %v836 = vpop.f32.mrb[0].mxu0
        %837 = vdwg.mxu0
        %v838 = vpack.c.bf16 %v624, %v623
        %s839 = scalar_lea.vmem [#allocation7], 128
        %v840 = vld [vmem:[%s839] sm:$0xf]
        %v841 = vld [vmem:[%s839 + $0x4] sm:$0xf]
        %v842 = vld [vmem:[%s839 + $0x8] sm:$0xf]
        %v843 = vld [vmem:[%s839 + $0xc] sm:$0xf]
        %v844 = vld [vmem:[%s839 + $0x10] sm:$0xf]
        %v845 = vld [vmem:[%s839 + $0x14] sm:$0xf]
        %v846 = vld [vmem:[%s839 + $0x18] sm:$0xf]
        %v847 = vld [vmem:[%s839 + $0x1c] sm:$0xf]
        %v848 = vld [vmem:[%s839 + $0x20] sm:$0xf]
        %v849 = vld [vmem:[%s839 + $0x24] sm:$0xf]
        %v850 = vld [vmem:[%s839 + $0x28] sm:$0xf]
        %v851 = vld [vmem:[%s839 + $0x2c] sm:$0xf]
        %v852 = vld [vmem:[%s839 + $0x30] sm:$0xf]
        %v853 = vld [vmem:[%s839 + $0x34] sm:$0xf]
        %v854 = vld [vmem:[%s839 + $0x38] sm:$0xf]
        %v855 = vld [vmem:[%s839 + $0x3c] sm:$0xf]
        %v872 = vunpack.c.l.b16 %v840
        %v873 = vunpack.c.l.b16 %v841
        %v874 = vunpack.c.l.b16 %v842
        %v875 = vunpack.c.l.b16 %v843
        %v876 = vunpack.c.l.b16 %v844
        %v877 = vunpack.c.l.b16 %v845
        %v878 = vunpack.c.l.b16 %v846
        %v879 = vunpack.c.l.b16 %v847
        %v880 = vunpack.c.l.b16 %v848
        %v881 = vunpack.c.l.b16 %v849
        %v882 = vunpack.c.l.b16 %v850
        %v883 = vunpack.c.l.b16 %v851
        %v884 = vunpack.c.l.b16 %v852
        %v885 = vunpack.c.l.b16 %v853
        %v886 = vunpack.c.l.b16 %v854
        %v887 = vunpack.c.l.b16 %v855
        %v888 = vpack.c.b16 %v873, %v872
        %v889 = vpack.c.b16 %v875, %v874
        %v890 = vpack.c.b16 %v877, %v876
        %v891 = vpack.c.b16 %v879, %v878
        %v892 = vpack.c.b16 %v881, %v880
        %v893 = vpack.c.b16 %v883, %v882
        %v894 = vpack.c.b16 %v885, %v884
        %v895 = vpack.c.b16 %v887, %v886
        %904 = vmatprep.subr.bf16.mxu0 0
        %905 = vmatpush1.bf16.msra.mxu0 %v888
        %906 = vmatprep.subr.bf16.mxu0 0
        %907 = vmatpush1.bf16.msra.mxu0 %v889
        %908 = vmatprep.subr.bf16.mxu0 0
        %909 = vmatpush1.bf16.msra.mxu0 %v890
        %910 = vmatprep.subr.bf16.mxu0 0
        %911 = vmatpush1.bf16.msra.mxu0 %v891
        %912 = vmatprep.subr.bf16.mxu0 0
        %913 = vmatpush1.bf16.msra.mxu0 %v892
        %914 = vmatprep.subr.bf16.mxu0 0
        %915 = vmatpush1.bf16.msra.mxu0 %v893
        %916 = vmatprep.subr.bf16.mxu0 0
        %917 = vmatpush1.bf16.msra.mxu0 %v894
        %918 = vmatprep.subr.bf16.mxu0 0
        %919 = vmatpush1.bf16.msra.mxu0 %v895
        %920 = vmatprep.subr.bf16.mxu0 0
        %921 = vmatpush1.bf16.msra.mxu0 0
        %922 = vmatprep.subr.bf16.mxu0 0
        %923 = vmatpush1.bf16.msra.mxu0 0
        %924 = vmatprep.subr.bf16.mxu0 0
        %925 = vmatpush1.bf16.msra.mxu0 0
        %926 = vmatprep.subr.bf16.mxu0 0
        %927 = vmatpush1.bf16.msra.mxu0 0
        %928 = vmatprep.subr.bf16.mxu0 0
        %929 = vmatpush1.bf16.msra.mxu0 0
        %930 = vmatprep.subr.bf16.mxu0 0
        %931 = vmatpush1.bf16.msra.mxu0 0
        %932 = vmatprep.subr.bf16.mxu0 0
        %933 = vmatpush1.bf16.msra.mxu0 0
        %934 = vmatprep.subr.bf16.mxu0 0
        %935 = vmatpush1.bf16.msra.mxu0 0
        %936 = vmatprep.mubr.bf16.mxu0 0
        %937 = vmatmul.mubr.bf16.gmra.mrb[0].mxu0 %v838
        %v938 = vpop.f32.mrb[0].mxu0
        %v939 = vadd.f32 0.0, %v938
        %v940 = vpop.f32.mrb[0].mxu0
        %v941 = vpop.f32.mrb[0].mxu0
        %v942 = vadd.f32 0.0, %v941
        %v943 = vpop.f32.mrb[0].mxu0
        %944 = vdwg.mxu0
        %v945 = vadd.f32 %v832, %v939
        %v946 = vadd.f32 %v835, %v942
        %v947 = vld [vmem:[%s4] sm:$0x1]
        %v949 = vlaneseq
        %v950 = vshrl.u32 %v949, 7
        %v951 = vsub.s32 0, %v950
        %v952 = vrot.slane %v947, %v951
        %v954 = vadd.f32 %v945, %v952
        %v955 = vadd.f32 %v946, %v952
        %v956 = vmax.f32 %v954, 0.0
        %v957 = vmax.f32 %v955, 0.0
        %v958 = vadd.f32 %v956, %v957
        %v959 = vrot.slane %v958, 4
        %v960 = vadd.f32 %v958, %v959
        %v961 = vrot.slane %v960, 2
        %v962 = vadd.f32 %v960, %v961
        %v963 = vrot.slane %v962, 1
        %v964 = vadd.f32 %v962, %v963
        %v965 = vrcp.pop 16.0
        %v966 = vmul.f32 %v964, %v965
        %v967 = vpack.c.bf16 %v966, %v966
        %v968 = vld [vmem:[#allocation8] sm:$0xf]
        %v969 = vld [vmem:[#allocation8 + $0x4] sm:$0xf]
        %v970 = vld [vmem:[#allocation8 + $0x8] sm:$0xf]
        %v971 = vld [vmem:[#allocation8 + $0xc] sm:$0xf]
        %v972 = vld [vmem:[#allocation8 + $0x10] sm:$0xf]
        %v973 = vld [vmem:[#allocation8 + $0x14] sm:$0xf]
        %v974 = vld [vmem:[#allocation8 + $0x18] sm:$0xf]
        %v975 = vld [vmem:[#allocation8 + $0x1c] sm:$0xf]
        %v976 = vld [vmem:[#allocation8 + $0x20] sm:$0xf]
        %v977 = vld [vmem:[#allocation8 + $0x24] sm:$0xf]
        %v978 = vld [vmem:[#allocation8 + $0x28] sm:$0xf]
        %v979 = vld [vmem:[#allocation8 + $0x2c] sm:$0xf]
        %v980 = vld [vmem:[#allocation8 + $0x30] sm:$0xf]
        %v981 = vld [vmem:[#allocation8 + $0x34] sm:$0xf]
        %v982 = vld [vmem:[#allocation8 + $0x38] sm:$0xf]
        %v983 = vld [vmem:[#allocation8 + $0x3c] sm:$0xf]
        %v984 = vld [vmem:[%s6] sm:$0x1]
        %v1001 = vunpack.c.l.b16 %v968
        %v1002 = vunpack.c.l.b16 %v969
        %v1003 = vunpack.c.l.b16 %v970
        %v1004 = vunpack.c.l.b16 %v971
        %v1005 = vunpack.c.l.b16 %v972
        %v1006 = vunpack.c.l.b16 %v973
        %v1007 = vunpack.c.l.b16 %v974
        %v1008 = vunpack.c.l.b16 %v975
        %v1009 = vunpack.c.l.b16 %v976
        %v1010 = vunpack.c.l.b16 %v977
        %v1011 = vunpack.c.l.b16 %v978
        %v1012 = vunpack.c.l.b16 %v979
        %v1013 = vunpack.c.l.b16 %v980
        %v1014 = vunpack.c.l.b16 %v981
        %v1015 = vunpack.c.l.b16 %v982
        %v1016 = vunpack.c.l.b16 %v983
        %v1017 = vpack.c.b16 %v1002, %v1001
        %v1018 = vpack.c.b16 %v1004, %v1003
        %v1019 = vpack.c.b16 %v1006, %v1005
        %v1020 = vpack.c.b16 %v1008, %v1007
        %v1021 = vpack.c.b16 %v1010, %v1009
        %v1022 = vpack.c.b16 %v1012, %v1011
        %v1023 = vpack.c.b16 %v1014, %v1013
        %v1024 = vpack.c.b16 %v1016, %v1015
        %1033 = vmatprep.subr.bf16.mxu0 0
        %1034 = vmatpush1.bf16.msra.mxu0 %v1017
        %1035 = vmatprep.subr.bf16.mxu0 0
        %1036 = vmatpush1.bf16.msra.mxu0 %v1018
        %1037 = vmatprep.subr.bf16.mxu0 0
        %1038 = vmatpush1.bf16.msra.mxu0 %v1019
        %1039 = vmatprep.subr.bf16.mxu0 0
        %1040 = vmatpush1.bf16.msra.mxu0 %v1020
        %1041 = vmatprep.subr.bf16.mxu0 0
        %1042 = vmatpush1.bf16.msra.mxu0 %v1021
        %1043 = vmatprep.subr.bf16.mxu0 0
        %1044 = vmatpush1.bf16.msra.mxu0 %v1022
        %1045 = vmatprep.subr.bf16.mxu0 0
        %1046 = vmatpush1.bf16.msra.mxu0 %v1023
        %1047 = vmatprep.subr.bf16.mxu0 0
        %1048 = vmatpush1.bf16.msra.mxu0 %v1024
        %1049 = vmatprep.subr.bf16.mxu0 0
        %1050 = vmatpush1.bf16.msra.mxu0 0
        %1051 = vmatprep.subr.bf16.mxu0 0
        %1052 = vmatpush1.bf16.msra.mxu0 0
        %1053 = vmatprep.subr.bf16.mxu0 0
        %1054 = vmatpush1.bf16.msra.mxu0 0
        %1055 = vmatprep.subr.bf16.mxu0 0
        %1056 = vmatpush1.bf16.msra.mxu0 0
        %1057 = vmatprep.subr.bf16.mxu0 0
        %1058 = vmatpush1.bf16.msra.mxu0 0
        %1059 = vmatprep.subr.bf16.mxu0 0
        %1060 = vmatpush1.bf16.msra.mxu0 0
        %1061 = vmatprep.subr.bf16.mxu0 0
        %1062 = vmatpush1.bf16.msra.mxu0 0
        %1063 = vmatprep.subr.bf16.mxu0 0
        %1064 = vmatpush1.bf16.msra.mxu0 0
        %1065 = vmatprep.mubr.bf16.mxu0 0
        %1066 = vmatmul.mubr.bf16.gmra.mrb[0].mxu0 %v967
        %v1067 = vpop.f32.mrb[0].mxu0
        %v1068 = vadd.f32 %v984, %v1067
        %v1069 = vpop.f32.mrb[0].mxu0
        %v1070 = vpop.f32.mrb[0].mxu0
        %v1071 = vpop.f32.mrb[0].mxu0
        %1072 = vdwg.mxu0
        %v1073 = vmax.f32 %v1068, 0.0
        %v1074 = vpack.c.bf16 %v1073, %v1073
        %v1075 = vld [vmem:[#allocation10] sm:$0xf]
        %v1076 = vld [vmem:[#allocation10 + $0x4] sm:$0xf]
        %v1077 = vld [vmem:[#allocation10 + $0x8] sm:$0xf]
        %v1078 = vld [vmem:[#allocation10 + $0xc] sm:$0xf]
        %v1079 = vld [vmem:[#allocation10 + $0x10] sm:$0xf]
        %v1080 = vld [vmem:[#allocation10 + $0x14] sm:$0xf]
        %v1081 = vld [vmem:[#allocation10 + $0x18] sm:$0xf]
        %v1082 = vld [vmem:[#allocation10 + $0x1c] sm:$0xf]
        %v1083 = vld [vmem:[#allocation10 + $0x20] sm:$0xf]
        %v1084 = vld [vmem:[#allocation10 + $0x24] sm:$0xf]
        %v1085 = vld [vmem:[#allocation10 + $0x28] sm:$0xf]
        %v1086 = vld [vmem:[#allocation10 + $0x2c] sm:$0xf]
        %v1087 = vld [vmem:[#allocation10 + $0x30] sm:$0xf]
        %v1088 = vld [vmem:[#allocation10 + $0x34] sm:$0xf]
        %v1089 = vld [vmem:[#allocation10 + $0x38] sm:$0xf]
        %v1090 = vld [vmem:[#allocation10 + $0x3c] sm:$0xf]
        %v1091 = vld [vmem:[%s8] sm:$0x1]
        %v1108 = vunpack.c.l.b16 %v1075
        %v1109 = vunpack.c.l.b16 %v1076
        %v1110 = vunpack.c.l.b16 %v1077
        %v1111 = vunpack.c.l.b16 %v1078
        %v1112 = vunpack.c.l.b16 %v1079
        %v1113 = vunpack.c.l.b16 %v1080
        %v1114 = vunpack.c.l.b16 %v1081
        %v1115 = vunpack.c.l.b16 %v1082
        %v1116 = vunpack.c.l.b16 %v1083
        %v1117 = vunpack.c.l.b16 %v1084
        %v1118 = vunpack.c.l.b16 %v1085
        %v1119 = vunpack.c.l.b16 %v1086
        %v1120 = vunpack.c.l.b16 %v1087
        %v1121 = vunpack.c.l.b16 %v1088
        %v1122 = vunpack.c.l.b16 %v1089
        %v1123 = vunpack.c.l.b16 %v1090
        %v1124 = vpack.c.b16 %v1109, %v1108
        %v1125 = vpack.c.b16 %v1111, %v1110
        %v1126 = vpack.c.b16 %v1113, %v1112
        %v1127 = vpack.c.b16 %v1115, %v1114
        %v1128 = vpack.c.b16 %v1117, %v1116
        %v1129 = vpack.c.b16 %v1119, %v1118
        %v1130 = vpack.c.b16 %v1121, %v1120
        %v1131 = vpack.c.b16 %v1123, %v1122
        %1140 = vmatprep.subr.bf16.mxu0 0
        %1141 = vmatpush1.bf16.msra.mxu0 %v1124
        %1142 = vmatprep.subr.bf16.mxu0 0
        %1143 = vmatpush1.bf16.msra.mxu0 %v1125
        %1144 = vmatprep.subr.bf16.mxu0 0
        %1145 = vmatpush1.bf16.msra.mxu0 %v1126
        %1146 = vmatprep.subr.bf16.mxu0 0
        %1147 = vmatpush1.bf16.msra.mxu0 %v1127
        %1148 = vmatprep.subr.bf16.mxu0 0
        %1149 = vmatpush1.bf16.msra.mxu0 %v1128
        %1150 = vmatprep.subr.bf16.mxu0 0
        %1151 = vmatpush1.bf16.msra.mxu0 %v1129
        %1152 = vmatprep.subr.bf16.mxu0 0
        %1153 = vmatpush1.bf16.msra.mxu0 %v1130
        %1154 = vmatprep.subr.bf16.mxu0 0
        %1155 = vmatpush1.bf16.msra.mxu0 %v1131
        %1156 = vmatprep.subr.bf16.mxu0 0
        %1157 = vmatpush1.bf16.msra.mxu0 0
        %1158 = vmatprep.subr.bf16.mxu0 0
        %1159 = vmatpush1.bf16.msra.mxu0 0
        %1160 = vmatprep.subr.bf16.mxu0 0
        %1161 = vmatpush1.bf16.msra.mxu0 0
        %1162 = vmatprep.subr.bf16.mxu0 0
        %1163 = vmatpush1.bf16.msra.mxu0 0
        %1164 = vmatprep.subr.bf16.mxu0 0
        %1165 = vmatpush1.bf16.msra.mxu0 0
        %1166 = vmatprep.subr.bf16.mxu0 0
        %1167 = vmatpush1.bf16.msra.mxu0 0
        %1168 = vmatprep.subr.bf16.mxu0 0
        %1169 = vmatpush1.bf16.msra.mxu0 0
        %1170 = vmatprep.subr.bf16.mxu0 0
        %1171 = vmatpush1.bf16.msra.mxu0 0
        %1172 = vmatprep.mubr.bf16.mxu0 0
        %1173 = vmatmul.mubr.bf16.gmra.mrb[0].mxu0 %v1074
        %v1174 = vpop.f32.mrb[0].mxu0
        %v1175 = vadd.f32 %v1091, %v1174
        %v1176 = vpop.f32.mrb[0].mxu0
        %v1177 = vpop.f32.mrb[0].mxu0
        %v1178 = vpop.f32.mrb[0].mxu0
        %1179 = vdwg.mxu0
        %v1180 = vxor.u32 %v1175, 2147483648
        %v1181 = vmul.f32 %v1180, 1.442695
        %v1182 = vpow.pop %v1181
        %v1183 = vadd.f32 %v1182, 1.0
        %v1184 = vrcp.pop %v1183
        %v1185 = vmul.f32 1.0, %v1184
        %v1186 = vlaneseq
        %v1187 = vshrl.u32 %v1186, 7
        %v1188 = vsub.s32 0, %v1187
        %v1189 = vrot.slane %v1185, %v1188
        %v1190 = vmul.f32 %v1189, %v956
        %v1191 = vmul.f32 %v1189, %v957
        %v1192 = vpack.c.bf16 %v1191, %v1190
        %v1193 = vld [vmem:[#allocation11] sm:$0xf]
        %v1194 = vld [vmem:[#allocation11 + $0x4] sm:$0xf]
        %v1195 = vld [vmem:[#allocation11 + $0x8] sm:$0xf]
        %v1196 = vld [vmem:[#allocation11 + $0xc] sm:$0xf]
        %v1197 = vld [vmem:[#allocation11 + $0x10] sm:$0xf]
        %v1198 = vld [vmem:[#allocation11 + $0x14] sm:$0xf]
        %v1199 = vld [vmem:[#allocation11 + $0x18] sm:$0xf]
        %v1200 = vld [vmem:[#allocation11 + $0x1c] sm:$0xf]
        %v1201 = vld [vmem:[#allocation11 + $0x20] sm:$0xf]
        %v1202 = vld [vmem:[#allocation11 + $0x24] sm:$0xf]
        %v1203 = vld [vmem:[#allocation11 + $0x28] sm:$0xf]
        %v1204 = vld [vmem:[#allocation11 + $0x2c] sm:$0xf]
        %v1205 = vld [vmem:[#allocation11 + $0x30] sm:$0xf]
        %v1206 = vld [vmem:[#allocation11 + $0x34] sm:$0xf]
        %v1207 = vld [vmem:[#allocation11 + $0x38] sm:$0xf]
        %v1208 = vld [vmem:[#allocation11 + $0x3c] sm:$0xf]
        %v1209 = vld [vmem:[%s10] sm:$0x1]
        %v1211 = vlaneseq
        %v1212 = vshrl.u32 %v1211, 7
        %v1213 = vsub.s32 0, %v1212
        %v1214 = vrot.slane %v1209, %v1213
        %v1232 = vunpack.c.l.b16 %v1193
        %v1233 = vunpack.c.l.b16 %v1194
        %v1234 = vunpack.c.l.b16 %v1195
        %v1235 = vunpack.c.l.b16 %v1196
        %v1236 = vunpack.c.l.b16 %v1197
        %v1237 = vunpack.c.l.b16 %v1198
        %v1238 = vunpack.c.l.b16 %v1199
        %v1239 = vunpack.c.l.b16 %v1200
        %v1240 = vunpack.c.l.b16 %v1201
        %v1241 = vunpack.c.l.b16 %v1202
        %v1242 = vunpack.c.l.b16 %v1203
        %v1243 = vunpack.c.l.b16 %v1204
        %v1244 = vunpack.c.l.b16 %v1205
        %v1245 = vunpack.c.l.b16 %v1206
        %v1246 = vunpack.c.l.b16 %v1207
        %v1247 = vunpack.c.l.b16 %v1208
        %v1248 = vpack.c.b16 %v1233, %v1232
        %v1249 = vpack.c.b16 %v1235, %v1234
        %v1250 = vpack.c.b16 %v1237, %v1236
        %v1251 = vpack.c.b16 %v1239, %v1238
        %v1252 = vpack.c.b16 %v1241, %v1240
        %v1253 = vpack.c.b16 %v1243, %v1242
        %v1254 = vpack.c.b16 %v1245, %v1244
        %v1255 = vpack.c.b16 %v1247, %v1246
        %1264 = vmatprep.subr.bf16.mxu0 0
        %1265 = vmatpush1.bf16.msra.mxu0 %v1248
        %1266 = vmatprep.subr.bf16.mxu0 0
        %1267 = vmatpush1.bf16.msra.mxu0 %v1249
        %1268 = vmatprep.subr.bf16.mxu0 0
        %1269 = vmatpush1.bf16.msra.mxu0 %v1250
        %1270 = vmatprep.subr.bf16.mxu0 0
        %1271 = vmatpush1.bf16.msra.mxu0 %v1251
        %1272 = vmatprep.subr.bf16.mxu0 0
        %1273 = vmatpush1.bf16.msra.mxu0 %v1252
        %1274 = vmatprep.subr.bf16.mxu0 0
        %1275 = vmatpush1.bf16.msra.mxu0 %v1253
        %1276 = vmatprep.subr.bf16.mxu0 0
        %1277 = vmatpush1.bf16.msra.mxu0 %v1254
        %1278 = vmatprep.subr.bf16.mxu0 0
        %1279 = vmatpush1.bf16.msra.mxu0 %v1255
        %1280 = vmatprep.subr.bf16.mxu0 0
        %1281 = vmatpush1.bf16.msra.mxu0 0
        %1282 = vmatprep.subr.bf16.mxu0 0
        %1283 = vmatpush1.bf16.msra.mxu0 0
        %1284 = vmatprep.subr.bf16.mxu0 0
        %1285 = vmatpush1.bf16.msra.mxu0 0
        %1286 = vmatprep.subr.bf16.mxu0 0
        %1287 = vmatpush1.bf16.msra.mxu0 0
        %1288 = vmatprep.subr.bf16.mxu0 0
        %1289 = vmatpush1.bf16.msra.mxu0 0
        %1290 = vmatprep.subr.bf16.mxu0 0
        %1291 = vmatpush1.bf16.msra.mxu0 0
        %1292 = vmatprep.subr.bf16.mxu0 0
        %1293 = vmatpush1.bf16.msra.mxu0 0
        %1294 = vmatprep.subr.bf16.mxu0 0
        %1295 = vmatpush1.bf16.msra.mxu0 0
        %1296 = vmatprep.mubr.bf16.mxu0 0
        %1297 = vmatmul.mubr.bf16.gmra.mrb[0].mxu0 %v1192
        %v1298 = vpop.f32.mrb[0].mxu0
        %v1299 = vadd.f32 %v1214, %v1298
        %v1300 = vpop.f32.mrb[0].mxu0
        %v1301 = vpop.f32.mrb[0].mxu0
        %v1302 = vadd.f32 %v1214, %v1301
        %v1303 = vpop.f32.mrb[0].mxu0
        %1304 = vdwg.mxu0
        %v1305 = vadd.f32 %v1299, %v479
        %v1306 = vadd.f32 %v1302, %v480
        %v1307 = vmax.f32 %v1305, 0.0
        %v1308 = vmax.f32 %v1306, 0.0
        %1309 = vst [vmem:[%s477] sm:$0xff] %v1307
        %1310 = vst [vmem:[%s477 + $0x8] sm:$0xff] %v1308
        %s1311 = sand.u32 %s275, 1
        %s1312 = scalar_lea.sflag [#allocation4], %s1311
        %s1313 = sand.u32 %s275, 1
        %s1314 = smul.addr %s1313, 16
        %s1315 = scalar_lea.vmem [#allocation13], %s1314
        // Predicated region
        $region89: #{tpu_custom_call.1} parent=63 // pred_check
          %p1316 = pneg %p285
        $region90: #{tpu_custom_call.1} parent=63 // pred_check_branch
          %1318 = sbr.rel (%p1316) target = $region92
        $region91: #{tpu_custom_call.1} parent=63 // pred_region
          %s1320 = ssub.s32 256, 256
          %1321 = vsyncadd %s1312, %s1320
          %s1322 = smul.addr %s31, 2
          %s1323 = smul.addr %s1322, 128
          %s1324 = scalar_lea.hbm %s11, %s1323
          %s1325 = sshll.u32 %s1315, 4
          %s1326 = int_to_ptr.vmem [resolvable:$true] %s1325
          %1331 = dma.vmem_to_hbm [thread:$0]  %s1326, 256, %s1324, %s1312, 128, 128, 8
        $region92: #{tpu_custom_call.1} parent=63 // pred_fallthru
          _
      $region64: #{tpu_custom_call.1} parent=5 // pred_fallthru
        _
      %p1332 = scmp.le.s32.totalorder 2, %s26
      // Predicated region
      $region93: #{tpu_custom_call.1} parent=5 // pred_check
        %p1333 = pneg %p1332
      $region94: #{tpu_custom_call.1} parent=5 // pred_check_branch
        %1335 = sbr.rel (%p1333) target = $region96
      $region95: #{tpu_custom_call.1} parent=5 // pred_region
        %s1336 = ssub.s32 %s26, 2
        // Predicated region
        $region97: #{tpu_custom_call.1} parent=95 // pred_check
          %p1337 = pneg %p291
        $region98: #{tpu_custom_call.1} parent=95 // pred_check_branch
          %1339 = sbr.rel (%p1337) target = $region100
        $region99: #{tpu_custom_call.1} parent=95 // pred_region
          %s1340 = sand.u32 %s276, 1
          %s1341 = scalar_lea.sflag [#allocation4], %s1340
          %s1342 = sand.u32 %s276, 1
          %s1343 = smul.addr %s1342, 16
          %s1344 = scalar_lea.vmem [#allocation13], %s1343
          %1345 = dma.done %s1341, 256
        $region100: #{tpu_custom_call.1} parent=95 // pred_fallthru
          _
      $region96: #{tpu_custom_call.1} parent=5 // pred_fallthru
        _
    $region6: #{tpu_custom_call.1} parent=1 // loop_footer
      %s30 = sadd.s32 1, %s26
    $region7: #{tpu_custom_call.1} parent=1 // loop_footer_branch
      %25 = sbr.rel target = $region3
    $region8: #{tpu_custom_call.1} parent=1 // loop_exit
      _
    %1346 = vsyncpa [#allocation3], 1
    %s1347 = scalar_lea.sflag [#allocation3], 1
    %1348 = vsyncpa %s1347, 1
    %1349 = vsyncpa [#allocation6], 1
    %1350 = vsyncpa [#allocation9], 1
    %1351 = vsyncpa [#allocation12], 1
    %1352 = vsyncpa [#allocation4], 1
    %s1353 = scalar_lea.sflag [#allocation4], 1
    %1354 = vsyncpa %s1353, 1

</llo_original>
